<compile_context>
chip_gen: v7x
topology: tpu7x:2x2x1
jax: 0.10.0
libtpu: 0.0.40
codegen_flags: <defaults>
</compile_context>

<pallas_src>
import jax
import jax.numpy as jnp
from jax import lax
from jax.experimental import pallas as pl
from jax.experimental.pallas import tpu as pltpu


def _sigmoid(x):
    # tanh-based logistic: stable, runs on the EUP (no VALU divide / exp overflow).
    return 0.5 * jnp.tanh(0.5 * x) + 0.5


# -----------------------------------------------------------------------------
# Fused kernel: one grid step processes `bb` graph pairs end-to-end and writes
# the final (bb, 1) sigmoid scores directly.
# -----------------------------------------------------------------------------
def perfguard_fused_kernel(a1_ref, a2_ref, x1_ref, x2_ref,
                           wg_ref, bg_ref, wa1_ref, ba1_ref, wa2_ref, ba2_ref,
                           w1x_ref, w1y_ref, b1_ref, t1_ref, sexp_ref, gsum_ref,
                           bnsc_ref, bnsh_ref, wout_ref, bout_ref,
                           out_ref):
    bb, n, _ = a1_ref.shape
    inv_n = 1.0 / float(n)

    def norm_prop(a, x):
        # F = D^-1/2 (A+I) D^-1/2 X  ==  dinv * (A @ (dinv*x) + dinv*x), batched over bb.
        d = jnp.sum(a, axis=2, keepdims=True) + 1.0            # rowsum(A) + 1  (no eye)
        dinv = jnp.where(d > 0.0, lax.rsqrt(d), 0.0)           # inf -> 0 (matches reference)
        z = dinv * x                                            # (bb, n, Din)
        az = jnp.einsum("bij,bjd->bid", a, z,
                        preferred_element_type=jnp.float32)     # batched A @ z
        return dinv * (az + z)                                  # (bb, n, Din)

    # ---- GCN: both branches and all bb pairs share Wg -> one stacked matmul ----
    f1 = norm_prop(a1_ref[...], x1_ref[...])                    # (bb, n, Din)
    f2 = norm_prop(a2_ref[...], x2_ref[...])                    # (bb, n, Din)
    din = f1.shape[2]
    f_all = jnp.concatenate([f1.reshape(bb * n, din),
                             f2.reshape(bb * n, din)], axis=0)  # (2*bb*n, Din)
    g_all = jnp.maximum(
        jnp.dot(f_all, wg_ref[...], preferred_element_type=jnp.float32) + bg_ref[...],
        0.0)                                                    # ReLU, (2*bb*n, E)
    e_dim = g_all.shape[1]

    g1_flat = g_all[:bb * n]                                    # (bb*n, E)
    g2_flat = g_all[bb * n:]                                    # (bb*n, E)
    ws1 = (jnp.dot(g1_flat, wa1_ref[...], preferred_element_type=jnp.float32)
           + ba1_ref[...]).reshape(bb, n, e_dim)
    ws2 = (jnp.dot(g2_flat, wa2_ref[...], preferred_element_type=jnp.float32)
           + ba2_ref[...]).reshape(bb, n, e_dim)
    g1 = g1_flat.reshape(bb, n, e_dim)
    g2 = g2_flat.reshape(bb, n, e_dim)

    # ---- Attention_Plus (batched over the bb pairs) + mean pooling over nodes ----
    e_mat = _sigmoid(jnp.einsum("bnk,bmk->bnm", ws1, ws2,
                                preferred_element_type=jnp.float32))   # (bb, n, n)
    y = jnp.einsum("bnm,bme->bne", e_mat, g2,
                   preferred_element_type=jnp.float32)                 # (bb, n, E)
    xo = (g1 * y + y - g1) * 0.5                                       # (bb, n, E)
    xm = jnp.sum(xo, axis=1) * inv_n                                   # (bb, E)
    ym = jnp.sum(y, axis=1) * inv_n                                    # (bb, E)

    # ---- NeuralTensorNetwork head (fused; no HBM round trip) ----
    lp = (jnp.dot(xm, w1x_ref[...], preferred_element_type=jnp.float32) +
          jnp.dot(ym, w1y_ref[...], preferred_element_type=jnp.float32) +
          b1_ref[...])                                                 # (bb, T)

    # bilinear term as a single lane-aligned matmul:
    #   zm[b, p*E+q] = sum_e xm[b,e] * T1[e,p,q]
    #   tp[b, p]     = sum_q zm[b, p*E+q] * ym[b, q]
    zm = jnp.dot(xm, t1_ref[...], preferred_element_type=jnp.float32)        # (bb, T*E)
    ym_rep = jnp.dot(ym, sexp_ref[...], preferred_element_type=jnp.float32)  # (bb, T*E), ym tiled T times
    tp = jnp.dot(zm * ym_rep, gsum_ref[...],
                 preferred_element_type=jnp.float32)                         # (bb, T)

    # BatchNorm1d (eval, folded) -> tanh -> dropout(identity) -> Linear(T,1) -> sigmoid
    r = jnp.tanh((tp + lp) * bnsc_ref[...] + bnsh_ref[...])                  # (bb, T)
    logits = jnp.dot(r, wout_ref[...], preferred_element_type=jnp.float32) + bout_ref[...]
    out_ref[0] = _sigmoid(logits)                                            # (bb, 1)


# -----------------------------------------------------------------------------
# Wrapper
# -----------------------------------------------------------------------------
def perfguard_forward(A1, A2, X1, X2, params, *, batch_block=None):
    B, N, _ = A1.shape
    Din = X1.shape[2]
    E = params["Wg"].shape[1]
    T = params["W1"].shape[1]

    # bb pairs per grid step; keep >=2 parallel grid blocks when B>=2 (v7x has 2 TCs).
    if batch_block is None:
        batch_block = max(1, min(8, pl.cdiv(B, 2)))
    bb = batch_block
    num_blocks = pl.cdiv(B, bb)
    B_pad = num_blocks * bb
    if B_pad != B:                      # pad batch so the grid tiles evenly (outputs sliced off)
        pad = B_pad - B
        A1 = jnp.pad(A1, ((0, pad), (0, 0), (0, 0)))
        A2 = jnp.pad(A2, ((0, pad), (0, 0), (0, 0)))
        X1 = jnp.pad(X1, ((0, pad), (0, 0), (0, 0)))
        X2 = jnp.pad(X2, ((0, pad), (0, 0), (0, 0)))

    # --- one-time parameter preprocessing (plain XLA, outside the kernel) ---
    # T1 flat index e*(T*E) + p*E + q  ->  T1_2d[e, p*E+q]  (plain reshape, no transpose)
    t1_2d = params["T1"].reshape(E, T * E)
    # sexp[q, t*E+q'] = (q == q')   -> ym @ sexp tiles ym T times along lanes
    sexp = jnp.tile(jnp.eye(E, dtype=jnp.float32), (1, T))                 # (E, T*E)
    # gsum[t*E+q, p] = (t == p)     -> grouped lane-sum back to (.., T)
    gsum = jnp.repeat(jnp.eye(T, dtype=jnp.float32), E, axis=0)            # (T*E, T)
    w1x = params["W1"][:E, :]                                              # (E, T)
    w1y = params["W1"][E:, :]                                              # (E, T)
    eps = 1e-5
    inv_std = 1.0 / jnp.sqrt(params["bn_var"] + eps)
    bn_scale = (params["bn_gamma"] * inv_std).reshape(1, T)
    bn_shift = (params["bn_beta"] - params["bn_mean"] * params["bn_gamma"] * inv_std).reshape(1, T)

    # NOTE: VMEM use here is tiny; for large N / bb set
    # pltpu.CompilerParams(vmem_limit_bytes=...) and shrink bb (esp. on v7x, 64 MiB VMEM).
    grid_spec = pltpu.PrefetchScalarGridSpec(
        num_scalar_prefetch=0,
        grid=(num_blocks,),
        in_specs=[
            pl.BlockSpec((bb, N, N), lambda i: (i, 0, 0)),      # A1
            pl.BlockSpec((bb, N, N), lambda i: (i, 0, 0)),      # A2
            pl.BlockSpec((bb, N, Din), lambda i: (i, 0, 0)),    # X1
            pl.BlockSpec((bb, N, Din), lambda i: (i, 0, 0)),    # X2
            pl.BlockSpec((Din, E), lambda i: (0, 0)),           # Wg
            pl.BlockSpec((1, E), lambda i: (0, 0)),             # bg
            pl.BlockSpec((E, E), lambda i: (0, 0)),             # Wa1
            pl.BlockSpec((1, E), lambda i: (0, 0)),             # ba1
            pl.BlockSpec((E, E), lambda i: (0, 0)),             # Wa2
            pl.BlockSpec((1, E), lambda i: (0, 0)),             # ba2
            pl.BlockSpec((E, T), lambda i: (0, 0)),             # W1 (X half)
            pl.BlockSpec((E, T), lambda i: (0, 0)),             # W1 (Y half)
            pl.BlockSpec((1, T), lambda i: (0, 0)),             # b1
            pl.BlockSpec((E, T * E), lambda i: (0, 0)),         # T1 (E, T*E)
            pl.BlockSpec((E, T * E), lambda i: (0, 0)),         # sexp
            pl.BlockSpec((T * E, T), lambda i: (0, 0)),         # gsum
            pl.BlockSpec((1, T), lambda i: (0, 0)),             # bn scale
            pl.BlockSpec((1, T), lambda i: (0, 0)),             # bn shift
            pl.BlockSpec((T, 1), lambda i: (0, 0)),             # w_out
            pl.BlockSpec((1, 1), lambda i: (0, 0)),             # b_out
        ],
        out_specs=pl.BlockSpec((1, bb, 1), lambda i: (i, 0, 0)),
    )
    out3 = pl.pallas_call(
        perfguard_fused_kernel,
        grid_spec=grid_spec,
        out_shape=jax.ShapeDtypeStruct((num_blocks, bb, 1), jnp.float32),
        compiler_params=pltpu.CompilerParams(dimension_semantics=("parallel",)),
    )(A1, A2, X1, X2,
      params["Wg"], params["bg"], params["Wa1"], params["ba1"],
      params["Wa2"], params["ba2"],
      w1x, w1y, params["b1"], t1_2d, sexp, gsum,
      bn_scale, bn_shift, params["w_out"], params["b_out"])

    return out3.reshape(-1)[:B]   # (B,)


# -----------------------------------------------------------------------------
# Pure-JAX reference (same eval-mode semantics) for a correctness check.
# -----------------------------------------------------------------------------
def reference_forward(A1, A2, X1, X2, params):
    E = params["Wg"].shape[1]
    T = params["W1"].shape[1]

    def prep(A):
        n = A.shape[1]
        a_hat = A + jnp.eye(n, dtype=A.dtype)[None]
        d = jnp.sum(a_hat, axis=2)
        dinv = jnp.where(d > 0, 1.0 / jnp.sqrt(d), 0.0)
        return dinv[:, :, None] * a_hat * dinv[:, None, :]

    def gcn(Anorm, X):
        F = jnp.einsum("bij,bjd->bid", Anorm, X)
        return jax.nn.relu(F @ params["Wg"] + params["bg"])

    g1 = gcn(prep(A1), X1)
    g2 = gcn(prep(A2), X2)
    ws1 = g1 @ params["Wa1"] + params["ba1"]
    ws2 = g2 @ params["Wa2"] + params["ba2"]
    e_mat = jax.nn.sigmoid(jnp.einsum("bnk,bmk->bnm", ws1, ws2))
    y = jnp.einsum("bnm,bme->bne", e_mat, g2)
    xo = (g1 * y + y - g1) / 2.0
    xm = xo.mean(axis=1)
    ymn = y.mean(axis=1)

    lp = jnp.concatenate([xm, ymn], axis=1) @ params["W1"] + params["b1"]
    t1 = params["T1"].reshape(E, T, E)
    tp = jnp.einsum("be,epq,bq->bp", xm, t1, ymn)
    eps = 1e-5
    r = jnp.tanh((tp + lp - params["bn_mean"]) /
                 jnp.sqrt(params["bn_var"] + eps) * params["bn_gamma"] + params["bn_beta"])
    return jax.nn.sigmoid(r @ params["w_out"] + params["b_out"]).reshape(-1)


def init_params(key, input_dim, embed_dim, tensor_dim):
    ks = jax.random.split(key, 12)

    def lin(kw, kb, fan_in, fan_out):
        bound = 1.0 / jnp.sqrt(fan_in)
        w = jax.random.uniform(kw, (fan_in, fan_out), jnp.float32, -bound, bound)
        b = jax.random.uniform(kb, (1, fan_out), jnp.float32, -bound, bound)
        return w, b

    Wg, bg = lin(ks[0], ks[1], input_dim, embed_dim)
    Wa1, ba1 = lin(ks[2], ks[3], embed_dim, embed_dim)
    Wa2, ba2 = lin(ks[4], ks[5], embed_dim, embed_dim)
    W1, b1 = lin(ks[6], ks[7], 2 * embed_dim, tensor_dim)
    w_out, b_out_row = lin(ks[8], ks[9], tensor_dim, 1)
    T1 = 0.02 * jax.random.normal(ks[10], (embed_dim * embed_dim * tensor_dim,), jnp.float32)

    return dict(
        Wg=Wg, bg=bg, Wa1=Wa1, ba1=ba1, Wa2=Wa2, ba2=ba2,
        W1=W1, b1=b1, T1=T1,
        bn_gamma=jnp.ones((tensor_dim,), jnp.float32),
        bn_beta=jnp.zeros((tensor_dim,), jnp.float32),
        bn_mean=jnp.zeros((tensor_dim,), jnp.float32),
        bn_var=jnp.ones((tensor_dim,), jnp.float32),
        w_out=w_out, b_out=b_out_row.reshape(1, 1),
    )


if __name__ == "__main__":
    key = jax.random.PRNGKey(0)
    # Config 1 exercises bb=1 with 2 parallel grid blocks; config 2 exercises
    # multi-pair-per-step (bb=3) plus the batch-padding path.
    configs = [
        dict(B=2, N=8, input_dim=16, embed_dim=32, tensor_dim=16),
        dict(B=5, N=8, input_dim=16, embed_dim=32, tensor_dim=16),
    ]
    for cfg in configs:
        B, N = cfg["B"], cfg["N"]
        input_dim, embed_dim, tensor_dim = cfg["input_dim"], cfg["embed_dim"], cfg["tensor_dim"]
        key, ka1, ka2, kx1, kx2, kp = jax.random.split(key, 6)

        A1 = (jax.random.uniform(ka1, (B, N, N)) < 0.4).astype(jnp.float32)
        A2 = (jax.random.uniform(ka2, (B, N, N)) < 0.4).astype(jnp.float32)
        X1 = jax.random.normal(kx1, (B, N, input_dim), jnp.float32)
        X2 = jax.random.normal(kx2, (B, N, input_dim), jnp.float32)

        params = init_params(kp, input_dim, embed_dim, tensor_dim)

        out = jax.block_until_ready(perfguard_forward(A1, A2, X1, X2, params))
        ref = jax.block_until_ready(reference_forward(A1, A2, X1, X2, params))
        assert out.shape == (B,)
        assert jnp.allclose(out, ref, atol=1e-3, rtol=1e-3), (out, ref)

    print("KERNEL_OK")
</pallas_src>

<mosaic_0001>
module attributes {stable_mosaic.version = 11 : i64} {
  func.func @perfguard_fused_kernel(%arg0: i32, %arg1: memref<1x8x8xf32, #tpu.memory_space<vmem>>, %arg2: memref<1x8x8xf32, #tpu.memory_space<vmem>>, %arg3: memref<1x8x16xf32, #tpu.memory_space<vmem>>, %arg4: memref<1x8x16xf32, #tpu.memory_space<vmem>>, %arg5: memref<16x32xf32, #tpu.memory_space<vmem>>, %arg6: memref<1x32xf32, #tpu.memory_space<vmem>>, %arg7: memref<32x32xf32, #tpu.memory_space<vmem>>, %arg8: memref<1x32xf32, #tpu.memory_space<vmem>>, %arg9: memref<32x32xf32, #tpu.memory_space<vmem>>, %arg10: memref<1x32xf32, #tpu.memory_space<vmem>>, %arg11: memref<32x16xf32, #tpu.memory_space<vmem>>, %arg12: memref<32x16xf32, #tpu.memory_space<vmem>>, %arg13: memref<1x16xf32, #tpu.memory_space<vmem>>, %arg14: memref<32x512xf32, #tpu.memory_space<vmem>>, %arg15: memref<32x512xf32, #tpu.memory_space<vmem>>, %arg16: memref<512x16xf32, #tpu.memory_space<vmem>>, %arg17: memref<1x16xf32, #tpu.memory_space<vmem>>, %arg18: memref<1x16xf32, #tpu.memory_space<vmem>>, %arg19: memref<16x1xf32, #tpu.memory_space<vmem>>, %arg20: memref<1x1xf32, #tpu.memory_space<vmem>>, %arg21: memref<1x1x1xf32, #tpu.memory_space<vmem>>) attributes {dimension_semantics = [#tpu.dimension_semantics<parallel>], iteration_bounds = array<i64: 2>, scalar_prefetch = 0 : i64, scratch_operands = 0 : i64, tpu.core_type = #tpu.core_type<tc>, window_params = [{transform_indices = @transform_0, window_bounds = array<i64: 1, 8, 8>}, {transform_indices = @transform_1, window_bounds = array<i64: 1, 8, 8>}, {transform_indices = @transform_2, window_bounds = array<i64: 1, 8, 16>}, {transform_indices = @transform_3, window_bounds = array<i64: 1, 8, 16>}, {pipeline_mode = #tpu.pipeline_mode<synchronous>, transform_indices = @transform_4, window_bounds = array<i64: 16, 32>}, {pipeline_mode = #tpu.pipeline_mode<synchronous>, transform_indices = @transform_5, window_bounds = array<i64: 1, 32>}, {pipeline_mode = #tpu.pipeline_mode<synchronous>, transform_indices = @transform_6, window_bounds = array<i64: 32, 32>}, {pipeline_mode = #tpu.pipeline_mode<synchronous>, transform_indices = @transform_7, window_bounds = array<i64: 1, 32>}, {pipeline_mode = #tpu.pipeline_mode<synchronous>, transform_indices = @transform_8, window_bounds = array<i64: 32, 32>}, {pipeline_mode = #tpu.pipeline_mode<synchronous>, transform_indices = @transform_9, window_bounds = array<i64: 1, 32>}, {pipeline_mode = #tpu.pipeline_mode<synchronous>, transform_indices = @transform_10, window_bounds = array<i64: 32, 16>}, {pipeline_mode = #tpu.pipeline_mode<synchronous>, transform_indices = @transform_11, window_bounds = array<i64: 32, 16>}, {pipeline_mode = #tpu.pipeline_mode<synchronous>, transform_indices = @transform_12, window_bounds = array<i64: 1, 16>}, {pipeline_mode = #tpu.pipeline_mode<synchronous>, transform_indices = @transform_13, window_bounds = array<i64: 32, 512>}, {pipeline_mode = #tpu.pipeline_mode<synchronous>, transform_indices = @transform_14, window_bounds = array<i64: 32, 512>}, {pipeline_mode = #tpu.pipeline_mode<synchronous>, transform_indices = @transform_15, window_bounds = array<i64: 512, 16>}, {pipeline_mode = #tpu.pipeline_mode<synchronous>, transform_indices = @transform_16, window_bounds = array<i64: 1, 16>}, {pipeline_mode = #tpu.pipeline_mode<synchronous>, transform_indices = @transform_17, window_bounds = array<i64: 1, 16>}, {pipeline_mode = #tpu.pipeline_mode<synchronous>, transform_indices = @transform_18, window_bounds = array<i64: 16, 1>}, {pipeline_mode = #tpu.pipeline_mode<synchronous>, transform_indices = @transform_19, window_bounds = array<i64: 1, 1>}, {transform_indices = @transform_20, window_bounds = array<i64: 1, 1, 1>}]} {
    %c0 = arith.constant 0 : index
    %c0_0 = arith.constant 0 : index
    %c0_1 = arith.constant 0 : index
    %0 = vector.load %arg1[%c0, %c0_0, %c0_1] : memref<1x8x8xf32, #tpu.memory_space<vmem>>, vector<1x8x8xf32>
    %c0_2 = arith.constant 0 : index
    %c0_3 = arith.constant 0 : index
    %c0_4 = arith.constant 0 : index
    %1 = vector.load %arg3[%c0_2, %c0_3, %c0_4] : memref<1x8x16xf32, #tpu.memory_space<vmem>>, vector<1x8x16xf32>
    %cst = arith.constant dense<0.000000e+00> : vector<1x8xf32>
    %2 = vector.multi_reduction <add>, %0, %cst [2] : vector<1x8x8xf32> to vector<1x8xf32>
    %3 = vector.shape_cast %2 : vector<1x8xf32> to vector<1x8x1xf32>
    %cst_5 = arith.constant 1.000000e+00 : f32
    %4 = vector.broadcast %cst_5 : f32 to vector<1x8x1xf32>
    %5 = arith.addf %3, %4 : vector<1x8x1xf32>
    %cst_6 = arith.constant 0.000000e+00 : f32
    %6 = vector.broadcast %cst_6 : f32 to vector<1x8x1xf32>
    %7 = arith.cmpf ogt, %5, %6 : vector<1x8x1xf32>
    %8 = math.rsqrt %5 : vector<1x8x1xf32>
    %cst_7 = arith.constant 0.000000e+00 : f32
    %9 = vector.broadcast %cst_7 : f32 to vector<1x8x1xf32>
    %10 = arith.select %7, %8, %9 : vector<1x8x1xi1>, vector<1x8x1xf32>
    %11 = vector.broadcast %10 : vector<1x8x1xf32> to vector<1x8x16xf32>
    %12 = arith.mulf %11, %1 : vector<1x8x16xf32>
    "tpu.trace_start"() <{level = 10 : i32, message = "bij,bjd->bid"}> : () -> ()
    %cst_8 = arith.constant dense<0.000000e+00> : vector<1x8x16xf32>
    %13 = tpu.matmul %0, %12, %cst_8 {dimension_numbers = #tpu.dot_dimension_numbers<[2], [1], [1], [2], [0, 0, 0, 1, 1, 2], [0], [0]>} : vector<1x8x8xf32>, vector<1x8x16xf32>, vector<1x8x16xf32> -> vector<1x8x16xf32>
    "tpu.trace_stop"() : () -> ()
    %14 = arith.addf %13, %12 : vector<1x8x16xf32>
    %15 = vector.broadcast %10 : vector<1x8x1xf32> to vector<1x8x16xf32>
    %16 = arith.mulf %15, %14 : vector<1x8x16xf32>
    %c0_9 = arith.constant 0 : index
    %c0_10 = arith.constant 0 : index
    %c0_11 = arith.constant 0 : index
    %17 = vector.load %arg2[%c0_9, %c0_10, %c0_11] : memref<1x8x8xf32, #tpu.memory_space<vmem>>, vector<1x8x8xf32>
    %c0_12 = arith.constant 0 : index
    %c0_13 = arith.constant 0 : index
    %c0_14 = arith.constant 0 : index
    %18 = vector.load %arg4[%c0_12, %c0_13, %c0_14] : memref<1x8x16xf32, #tpu.memory_space<vmem>>, vector<1x8x16xf32>
    %cst_15 = arith.constant dense<0.000000e+00> : vector<1x8xf32>
    %19 = vector.multi_reduction <add>, %17, %cst_15 [2] : vector<1x8x8xf32> to vector<1x8xf32>
    %20 = vector.shape_cast %19 : vector<1x8xf32> to vector<1x8x1xf32>
    %cst_16 = arith.constant 1.000000e+00 : f32
    %21 = vector.broadcast %cst_16 : f32 to vector<1x8x1xf32>
    %22 = arith.addf %20, %21 : vector<1x8x1xf32>
    %cst_17 = arith.constant 0.000000e+00 : f32
    %23 = vector.broadcast %cst_17 : f32 to vector<1x8x1xf32>
    %24 = arith.cmpf ogt, %22, %23 : vector<1x8x1xf32>
    %25 = math.rsqrt %22 : vector<1x8x1xf32>
    %cst_18 = arith.constant 0.000000e+00 : f32
    %26 = vector.broadcast %cst_18 : f32 to vector<1x8x1xf32>
    %27 = arith.select %24, %25, %26 : vector<1x8x1xi1>, vector<1x8x1xf32>
    %28 = vector.broadcast %27 : vector<1x8x1xf32> to vector<1x8x16xf32>
    %29 = arith.mulf %28, %18 : vector<1x8x16xf32>
    "tpu.trace_start"() <{level = 10 : i32, message = "bij,bjd->bid"}> : () -> ()
    %cst_19 = arith.constant dense<0.000000e+00> : vector<1x8x16xf32>
    %30 = tpu.matmul %17, %29, %cst_19 {dimension_numbers = #tpu.dot_dimension_numbers<[2], [1], [1], [2], [0, 0, 0, 1, 1, 2], [0], [0]>} : vector<1x8x8xf32>, vector<1x8x16xf32>, vector<1x8x16xf32> -> vector<1x8x16xf32>
    "tpu.trace_stop"() : () -> ()
    %31 = arith.addf %30, %29 : vector<1x8x16xf32>
    %32 = vector.broadcast %27 : vector<1x8x1xf32> to vector<1x8x16xf32>
    %33 = arith.mulf %32, %31 : vector<1x8x16xf32>
    %34 = vector.shape_cast %16 : vector<1x8x16xf32> to vector<8x16xf32>
    %35 = vector.shape_cast %33 : vector<1x8x16xf32> to vector<8x16xf32>
    %36 = tpu.concatenate %34, %35 in 0 : vector<8x16xf32>, vector<8x16xf32> -> vector<16x16xf32>
    %c0_20 = arith.constant 0 : index
    %c0_21 = arith.constant 0 : index
    %37 = vector.load %arg5[%c0_20, %c0_21] : memref<16x32xf32, #tpu.memory_space<vmem>>, vector<16x32xf32>
    %cst_22 = arith.constant dense<0.000000e+00> : vector<16x32xf32>
    %38 = tpu.matmul %36, %37, %cst_22 {dimension_numbers = #tpu.dot_dimension_numbers<[1], [0], [0], [1], [0, 0, 1, 1], [], []>} : vector<16x16xf32>, vector<16x32xf32>, vector<16x32xf32> -> vector<16x32xf32>
    %c0_23 = arith.constant 0 : index
    %c0_24 = arith.constant 0 : index
    %39 = vector.load %arg6[%c0_23, %c0_24] : memref<1x32xf32, #tpu.memory_space<vmem>>, vector<1x32xf32>
    %40 = vector.broadcast %39 : vector<1x32xf32> to vector<16x32xf32>
    %41 = arith.addf %38, %40 : vector<16x32xf32>
    %cst_25 = arith.constant 0.000000e+00 : f32
    %42 = vector.broadcast %cst_25 : f32 to vector<16x32xf32>
    %43 = arith.maximumf %41, %42 : vector<16x32xf32>
    %44 = vector.extract_strided_slice %43 {offsets = [0, 0], sizes = [8, 32], strides = [1, 1]} : vector<16x32xf32> to vector<8x32xf32>
    %45 = vector.extract_strided_slice %43 {offsets = [8, 0], sizes = [8, 32], strides = [1, 1]} : vector<16x32xf32> to vector<8x32xf32>
    %c0_26 = arith.constant 0 : index
    %c0_27 = arith.constant 0 : index
    %46 = vector.load %arg7[%c0_26, %c0_27] : memref<32x32xf32, #tpu.memory_space<vmem>>, vector<32x32xf32>
    %cst_28 = arith.constant dense<0.000000e+00> : vector<8x32xf32>
    %47 = tpu.matmul %44, %46, %cst_28 {dimension_numbers = #tpu.dot_dimension_numbers<[1], [0], [0], [1], [0, 0, 1, 1], [], []>} : vector<8x32xf32>, vector<32x32xf32>, vector<8x32xf32> -> vector<8x32xf32>
    %c0_29 = arith.constant 0 : index
    %c0_30 = arith.constant 0 : index
    %48 = vector.load %arg8[%c0_29, %c0_30] : memref<1x32xf32, #tpu.memory_space<vmem>>, vector<1x32xf32>
    %49 = vector.broadcast %48 : vector<1x32xf32> to vector<8x32xf32>
    %50 = arith.addf %47, %49 : vector<8x32xf32>
    %51 = vector.shape_cast %50 : vector<8x32xf32> to vector<1x8x32xf32>
    %c0_31 = arith.constant 0 : index
    %c0_32 = arith.constant 0 : index
    %52 = vector.load %arg9[%c0_31, %c0_32] : memref<32x32xf32, #tpu.memory_space<vmem>>, vector<32x32xf32>
    %cst_33 = arith.constant dense<0.000000e+00> : vector<8x32xf32>
    %53 = tpu.matmul %45, %52, %cst_33 {dimension_numbers = #tpu.dot_dimension_numbers<[1], [0], [0], [1], [0, 0, 1, 1], [], []>} : vector<8x32xf32>, vector<32x32xf32>, vector<8x32xf32> -> vector<8x32xf32>
    %c0_34 = arith.constant 0 : index
    %c0_35 = arith.constant 0 : index
    %54 = vector.load %arg10[%c0_34, %c0_35] : memref<1x32xf32, #tpu.memory_space<vmem>>, vector<1x32xf32>
    %55 = vector.broadcast %54 : vector<1x32xf32> to vector<8x32xf32>
    %56 = arith.addf %53, %55 : vector<8x32xf32>
    %57 = vector.shape_cast %56 : vector<8x32xf32> to vector<1x8x32xf32>
    %58 = vector.shape_cast %44 : vector<8x32xf32> to vector<1x8x32xf32>
    %59 = vector.shape_cast %45 : vector<8x32xf32> to vector<1x8x32xf32>
    "tpu.trace_start"() <{level = 10 : i32, message = "bnk,bmk->bnm"}> : () -> ()
    %cst_36 = arith.constant dense<0.000000e+00> : vector<1x8x8xf32>
    %60 = tpu.matmul %51, %57, %cst_36 {dimension_numbers = #tpu.dot_dimension_numbers<[2], [2], [1], [1], [0, 0, 0, 1, 1, 1], [0], [0]>} : vector<1x8x32xf32>, vector<1x8x32xf32>, vector<1x8x8xf32> -> vector<1x8x8xf32>
    "tpu.trace_stop"() : () -> ()
    %cst_37 = arith.constant 5.000000e-01 : f32
    %61 = vector.broadcast %cst_37 : f32 to vector<1x8x8xf32>
    %62 = arith.mulf %61, %60 : vector<1x8x8xf32>
    %63 = math.tanh %62 : vector<1x8x8xf32>
    %cst_38 = arith.constant 5.000000e-01 : f32
    %64 = vector.broadcast %cst_38 : f32 to vector<1x8x8xf32>
    %65 = arith.mulf %64, %63 : vector<1x8x8xf32>
    %cst_39 = arith.constant 5.000000e-01 : f32
    %66 = vector.broadcast %cst_39 : f32 to vector<1x8x8xf32>
    %67 = arith.addf %65, %66 : vector<1x8x8xf32>
    "tpu.trace_start"() <{level = 10 : i32, message = "bnm,bme->bne"}> : () -> ()
    %cst_40 = arith.constant dense<0.000000e+00> : vector<1x8x32xf32>
    %68 = tpu.matmul %67, %59, %cst_40 {dimension_numbers = #tpu.dot_dimension_numbers<[2], [1], [1], [2], [0, 0, 0, 1, 1, 2], [0], [0]>} : vector<1x8x8xf32>, vector<1x8x32xf32>, vector<1x8x32xf32> -> vector<1x8x32xf32>
    "tpu.trace_stop"() : () -> ()
    %69 = arith.mulf %58, %68 : vector<1x8x32xf32>
    %70 = arith.addf %69, %68 : vector<1x8x32xf32>
    %71 = arith.subf %70, %58 : vector<1x8x32xf32>
    %cst_41 = arith.constant 5.000000e-01 : f32
    %72 = vector.broadcast %cst_41 : f32 to vector<1x8x32xf32>
    %73 = arith.mulf %71, %72 : vector<1x8x32xf32>
    %cst_42 = arith.constant dense<0.000000e+00> : vector<1x32xf32>
    %74 = vector.multi_reduction <add>, %73, %cst_42 [1] : vector<1x8x32xf32> to vector<1x32xf32>
    %cst_43 = arith.constant 1.250000e-01 : f32
    %75 = vector.broadcast %cst_43 : f32 to vector<1x32xf32>
    %76 = arith.mulf %74, %75 : vector<1x32xf32>
    %cst_44 = arith.constant dense<0.000000e+00> : vector<1x32xf32>
    %77 = vector.multi_reduction <add>, %68, %cst_44 [1] : vector<1x8x32xf32> to vector<1x32xf32>
    %cst_45 = arith.constant 1.250000e-01 : f32
    %78 = vector.broadcast %cst_45 : f32 to vector<1x32xf32>
    %79 = arith.mulf %77, %78 : vector<1x32xf32>
    %c0_46 = arith.constant 0 : index
    %c0_47 = arith.constant 0 : index
    %80 = vector.load %arg11[%c0_46, %c0_47] : memref<32x16xf32, #tpu.memory_space<vmem>>, vector<32x16xf32>
    %cst_48 = arith.constant dense<0.000000e+00> : vector<1x16xf32>
    %81 = tpu.matmul %76, %80, %cst_48 {dimension_numbers = #tpu.dot_dimension_numbers<[1], [0], [0], [1], [0, 0, 1, 1], [], []>} : vector<1x32xf32>, vector<32x16xf32>, vector<1x16xf32> -> vector<1x16xf32>
    %c0_49 = arith.constant 0 : index
    %c0_50 = arith.constant 0 : index
    %82 = vector.load %arg12[%c0_49, %c0_50] : memref<32x16xf32, #tpu.memory_space<vmem>>, vector<32x16xf32>
    %cst_51 = arith.constant dense<0.000000e+00> : vector<1x16xf32>
    %83 = tpu.matmul %79, %82, %cst_51 {dimension_numbers = #tpu.dot_dimension_numbers<[1], [0], [0], [1], [0, 0, 1, 1], [], []>} : vector<1x32xf32>, vector<32x16xf32>, vector<1x16xf32> -> vector<1x16xf32>
    %84 = arith.addf %81, %83 : vector<1x16xf32>
    %c0_52 = arith.constant 0 : index
    %c0_53 = arith.constant 0 : index
    %85 = vector.load %arg13[%c0_52, %c0_53] : memref<1x16xf32, #tpu.memory_space<vmem>>, vector<1x16xf32>
    %86 = arith.addf %84, %85 : vector<1x16xf32>
    %c0_54 = arith.constant 0 : index
    %c0_55 = arith.constant 0 : index
    %87 = vector.load %arg14[%c0_54, %c0_55] : memref<32x512xf32, #tpu.memory_space<vmem>>, vector<32x512xf32>
    %cst_56 = arith.constant dense<0.000000e+00> : vector<1x512xf32>
    %88 = tpu.matmul %76, %87, %cst_56 {dimension_numbers = #tpu.dot_dimension_numbers<[1], [0], [0], [1], [0, 0, 1, 1], [], []>} : vector<1x32xf32>, vector<32x512xf32>, vector<1x512xf32> -> vector<1x512xf32>
    %c0_57 = arith.constant 0 : index
    %c0_58 = arith.constant 0 : index
    %89 = vector.load %arg15[%c0_57, %c0_58] : memref<32x512xf32, #tpu.memory_space<vmem>>, vector<32x512xf32>
    %cst_59 = arith.constant dense<0.000000e+00> : vector<1x512xf32>
    %90 = tpu.matmul %79, %89, %cst_59 {dimension_numbers = #tpu.dot_dimension_numbers<[1], [0], [0], [1], [0, 0, 1, 1], [], []>} : vector<1x32xf32>, vector<32x512xf32>, vector<1x512xf32> -> vector<1x512xf32>
    %91 = arith.mulf %88, %90 : vector<1x512xf32>
    %c0_60 = arith.constant 0 : index
    %c0_61 = arith.constant 0 : index
    %92 = vector.load %arg16[%c0_60, %c0_61] : memref<512x16xf32, #tpu.memory_space<vmem>>, vector<512x16xf32>
    %cst_62 = arith.constant dense<0.000000e+00> : vector<1x16xf32>
    %93 = tpu.matmul %91, %92, %cst_62 {dimension_numbers = #tpu.dot_dimension_numbers<[1], [0], [0], [1], [0, 0, 1, 1], [], []>} : vector<1x512xf32>, vector<512x16xf32>, vector<1x16xf32> -> vector<1x16xf32>
    %94 = arith.addf %93, %86 : vector<1x16xf32>
    %c0_63 = arith.constant 0 : index
    %c0_64 = arith.constant 0 : index
    %95 = vector.load %arg17[%c0_63, %c0_64] : memref<1x16xf32, #tpu.memory_space<vmem>>, vector<1x16xf32>
    %96 = arith.mulf %94, %95 : vector<1x16xf32>
    %c0_65 = arith.constant 0 : index
    %c0_66 = arith.constant 0 : index
    %97 = vector.load %arg18[%c0_65, %c0_66] : memref<1x16xf32, #tpu.memory_space<vmem>>, vector<1x16xf32>
    %98 = arith.addf %96, %97 : vector<1x16xf32>
    %99 = math.tanh %98 : vector<1x16xf32>
    %c0_67 = arith.constant 0 : index
    %c0_68 = arith.constant 0 : index
    %100 = vector.load %arg19[%c0_67, %c0_68] : memref<16x1xf32, #tpu.memory_space<vmem>>, vector<16x1xf32>
    %cst_69 = arith.constant dense<0.000000e+00> : vector<1x1xf32>
    %101 = tpu.matmul %99, %100, %cst_69 {dimension_numbers = #tpu.dot_dimension_numbers<[1], [0], [0], [1], [0, 0, 1, 1], [], []>} : vector<1x16xf32>, vector<16x1xf32>, vector<1x1xf32> -> vector<1x1xf32>
    %c0_70 = arith.constant 0 : index
    %c0_71 = arith.constant 0 : index
    %102 = vector.load %arg20[%c0_70, %c0_71] : memref<1x1xf32, #tpu.memory_space<vmem>>, vector<1x1xf32>
    %103 = arith.addf %101, %102 : vector<1x1xf32>
    %cst_72 = arith.constant 5.000000e-01 : f32
    %104 = vector.broadcast %cst_72 : f32 to vector<1x1xf32>
    %105 = arith.mulf %104, %103 : vector<1x1xf32>
    %106 = math.tanh %105 : vector<1x1xf32>
    %cst_73 = arith.constant 5.000000e-01 : f32
    %107 = vector.broadcast %cst_73 : f32 to vector<1x1xf32>
    %108 = arith.mulf %107, %106 : vector<1x1xf32>
    %cst_74 = arith.constant 5.000000e-01 : f32
    %109 = vector.broadcast %cst_74 : f32 to vector<1x1xf32>
    %110 = arith.addf %108, %109 : vector<1x1xf32>
    %c0_75 = arith.constant 0 : index
    %c0_76 = arith.constant 0 : index
    %c0_77 = arith.constant 0 : index
    %111 = vector.load %arg21[%c0_75, %c0_76, %c0_77] : memref<1x1x1xf32, #tpu.memory_space<vmem>>, vector<1x1x1xf32>
    %112 = vector.shape_cast %111 : vector<1x1x1xf32> to vector<1x1xf32>
    %113 = vector.shape_cast %110 : vector<1x1xf32> to vector<1x1x1xf32>
    tpu.vector_store %arg21[%c0_75, %c0_76, %c0_77], %113 {strides = array<i32>} : memref<1x1x1xf32, #tpu.memory_space<vmem>>, vector<1x1x1xf32>,
    return
  }
  func.func @transform_0(%arg0: i32) -> (i32, i32, i32) {
    %c0_i32 = arith.constant 0 : i32
    %c0_i32_0 = arith.constant 0 : i32
    %c0_i32_1 = arith.constant 0 : i32
    return %arg0, %c0_i32, %c0_i32_0 : i32, i32, i32
  }
  func.func @transform_1(%arg0: i32) -> (i32, i32, i32) {
    %c0_i32 = arith.constant 0 : i32
    %c0_i32_0 = arith.constant 0 : i32
    %c0_i32_1 = arith.constant 0 : i32
    return %arg0, %c0_i32, %c0_i32_0 : i32, i32, i32
  }
  func.func @transform_2(%arg0: i32) -> (i32, i32, i32) {
    %c0_i32 = arith.constant 0 : i32
    %c0_i32_0 = arith.constant 0 : i32
    %c0_i32_1 = arith.constant 0 : i32
    return %arg0, %c0_i32, %c0_i32_0 : i32, i32, i32
  }
  func.func @transform_3(%arg0: i32) -> (i32, i32, i32) {
    %c0_i32 = arith.constant 0 : i32
    %c0_i32_0 = arith.constant 0 : i32
    %c0_i32_1 = arith.constant 0 : i32
    return %arg0, %c0_i32, %c0_i32_0 : i32, i32, i32
  }
  func.func @transform_4(%arg0: i32) -> (i32, i32) {
    %c0_i32 = arith.constant 0 : i32
    %c0_i32_0 = arith.constant 0 : i32
    %c0_i32_1 = arith.constant 0 : i32
    return %c0_i32, %c0_i32_0 : i32, i32
  }
  func.func @transform_5(%arg0: i32) -> (i32, i32) {
    %c0_i32 = arith.constant 0 : i32
    %c0_i32_0 = arith.constant 0 : i32
    %c0_i32_1 = arith.constant 0 : i32
    return %c0_i32, %c0_i32_0 : i32, i32
  }
  func.func @transform_6(%arg0: i32) -> (i32, i32) {
    %c0_i32 = arith.constant 0 : i32
    %c0_i32_0 = arith.constant 0 : i32
    %c0_i32_1 = arith.constant 0 : i32
    return %c0_i32, %c0_i32_0 : i32, i32
  }
  func.func @transform_7(%arg0: i32) -> (i32, i32) {
    %c0_i32 = arith.constant 0 : i32
    %c0_i32_0 = arith.constant 0 : i32
    %c0_i32_1 = arith.constant 0 : i32
    return %c0_i32, %c0_i32_0 : i32, i32
  }
  func.func @transform_8(%arg0: i32) -> (i32, i32) {
    %c0_i32 = arith.constant 0 : i32
    %c0_i32_0 = arith.constant 0 : i32
    %c0_i32_1 = arith.constant 0 : i32
    return %c0_i32, %c0_i32_0 : i32, i32
  }
  func.func @transform_9(%arg0: i32) -> (i32, i32) {
    %c0_i32 = arith.constant 0 : i32
    %c0_i32_0 = arith.constant 0 : i32
    %c0_i32_1 = arith.constant 0 : i32
    return %c0_i32, %c0_i32_0 : i32, i32
  }
  func.func @transform_10(%arg0: i32) -> (i32, i32) {
    %c0_i32 = arith.constant 0 : i32
    %c0_i32_0 = arith.constant 0 : i32
    %c0_i32_1 = arith.constant 0 : i32
    return %c0_i32, %c0_i32_0 : i32, i32
  }
  func.func @transform_11(%arg0: i32) -> (i32, i32) {
    %c0_i32 = arith.constant 0 : i32
    %c0_i32_0 = arith.constant 0 : i32
    %c0_i32_1 = arith.constant 0 : i32
    return %c0_i32, %c0_i32_0 : i32, i32
  }
  func.func @transform_12(%arg0: i32) -> (i32, i32) {
    %c0_i32 = arith.constant 0 : i32
    %c0_i32_0 = arith.constant 0 : i32
    %c0_i32_1 = arith.constant 0 : i32
    return %c0_i32, %c0_i32_0 : i32, i32
  }
  func.func @transform_13(%arg0: i32) -> (i32, i32) {
    %c0_i32 = arith.constant 0 : i32
    %c0_i32_0 = arith.constant 0 : i32
    %c0_i32_1 = arith.constant 0 : i32
    return %c0_i32, %c0_i32_0 : i32, i32
  }
  func.func @transform_14(%arg0: i32) -> (i32, i32) {
    %c0_i32 = arith.constant 0 : i32
    %c0_i32_0 = arith.constant 0 : i32
    %c0_i32_1 = arith.constant 0 : i32
    return %c0_i32, %c0_i32_0 : i32, i32
  }
  func.func @transform_15(%arg0: i32) -> (i32, i32) {
    %c0_i32 = arith.constant 0 : i32
    %c0_i32_0 = arith.constant 0 : i32
    %c0_i32_1 = arith.constant 0 : i32
    return %c0_i32, %c0_i32_0 : i32, i32
  }
  func.func @transform_16(%arg0: i32) -> (i32, i32) {
    %c0_i32 = arith.constant 0 : i32
    %c0_i32_0 = arith.constant 0 : i32
    %c0_i32_1 = arith.constant 0 : i32
    return %c0_i32, %c0_i32_0 : i32, i32
  }
  func.func @transform_17(%arg0: i32) -> (i32, i32) {
    %c0_i32 = arith.constant 0 : i32
    %c0_i32_0 = arith.constant 0 : i32
    %c0_i32_1 = arith.constant 0 : i32
    return %c0_i32, %c0_i32_0 : i32, i32
  }
  func.func @transform_18(%arg0: i32) -> (i32, i32) {
    %c0_i32 = arith.constant 0 : i32
    %c0_i32_0 = arith.constant 0 : i32
    %c0_i32_1 = arith.constant 0 : i32
    return %c0_i32, %c0_i32_0 : i32, i32
  }
  func.func @transform_19(%arg0: i32) -> (i32, i32) {
    %c0_i32 = arith.constant 0 : i32
    %c0_i32_0 = arith.constant 0 : i32
    %c0_i32_1 = arith.constant 0 : i32
    return %c0_i32, %c0_i32_0 : i32, i32
  }
  func.func @transform_20(%arg0: i32) -> (i32, i32, i32) {
    %c0_i32 = arith.constant 0 : i32
    %c0_i32_0 = arith.constant 0 : i32
    %c0_i32_1 = arith.constant 0 : i32
    return %arg0, %c0_i32, %c0_i32_0 : i32, i32, i32
  }
}

</mosaic_0001>

<llo_original>
// kernel: tpu_custom_call.1
$region0: #{tpu_custom_call.1}
  #allocation0 [shape = 'u32[]', space=smem, size = 0x4, offset = 0x4, fixed_abs, tag = 'smem constant byte address 0x4 - core index']
  #allocation1 [shape = 'u32[144,128]{1,0:T(1,128)}', space=vmem, size = 0x12000, scoped, tag = 'internal scratch']
  #allocation2 [shape = 'f32[1,1]{1,0:T(1,128)S(1)}', space=vmem, size = 0x200, scoped, tag = 'scoped memory for tpu_custom_call.1']
  %s0 = inlined_call_operand.vmem [shape: f32[2,8,8], index: 0, kind: input, shape index: {}]
  %s1 = inlined_call_operand.vmem [shape: f32[2,8,8], index: 1, kind: input, shape index: {}]
  %s2 = inlined_call_operand.vmem [shape: f32[2,8,16], index: 2, kind: input, shape index: {}]
  %s3 = inlined_call_operand.vmem [shape: f32[2,8,16], index: 3, kind: input, shape index: {}]
  %s4 = inlined_call_operand.vmem [shape: f32[16,32], index: 4, kind: input, shape index: {}]
  %s5 = inlined_call_operand.vmem [shape: f32[1,32], index: 5, kind: input, shape index: {}]
  %s6 = inlined_call_operand.vmem [shape: f32[32,32], index: 6, kind: input, shape index: {}]
  %s7 = inlined_call_operand.vmem [shape: f32[1,32], index: 7, kind: input, shape index: {}]
  %s8 = inlined_call_operand.vmem [shape: f32[32,32], index: 8, kind: input, shape index: {}]
  %s9 = inlined_call_operand.vmem [shape: f32[1,32], index: 9, kind: input, shape index: {}]
  %s10 = inlined_call_operand.vmem [shape: f32[32,16], index: 10, kind: input, shape index: {}]
  %s11 = inlined_call_operand.vmem [shape: f32[32,16], index: 11, kind: input, shape index: {}]
  %s12 = inlined_call_operand.vmem [shape: f32[1,16], index: 12, kind: input, shape index: {}]
  %s13 = inlined_call_operand.vmem [shape: f32[32,512], index: 13, kind: input, shape index: {}]
  %s14 = inlined_call_operand.vmem [shape: f32[32,512], index: 14, kind: input, shape index: {}]
  %s15 = inlined_call_operand.vmem [shape: f32[512,16], index: 15, kind: input, shape index: {}]
  %s16 = inlined_call_operand.vmem [shape: f32[1,16], index: 16, kind: input, shape index: {}]
  %s17 = inlined_call_operand.vmem [shape: f32[1,16], index: 17, kind: input, shape index: {}]
  %s18 = inlined_call_operand.vmem [shape: f32[16,1], index: 18, kind: input, shape index: {}]
  %s19 = inlined_call_operand.<no memory space> [shape: f32[1,1], index: 19, kind: input, shape index: {}]
  %s20 = inlined_call_operand.vmem [shape: f32[2,1,1], index: 20, kind: output, shape index: {}]
  %s21 = sld [smem:[#allocation0]]
  $region113: #{tpu_custom_call.1} parent=0
    _
  %s23 = ssub.s32 1, %s21
  %s24 = scalar_select 0, %s23, %s21
  %v25 = vstv %s19
  %26 = vst [vmem:[#allocation2] sm:$0x1] %v25
  loop: start=0, step=1, limit=4
  $region2: #{tpu_custom_call.1} parent=0 // loop_pre_header
    _
  $region3: #{tpu_custom_call.1} parent=0 // loop_header
    %s28 = sphi 0, %s32
    %p29 = scmp.ge.s32.totalorder %s28, 4
    %s38 = sphi 0, %s40
    %s41 = sphi 0, %s38
    %s42 = sphi 0, %s41
    %s58 = sphi 0, %s42
    %s64 = sphi 0, %s66
    %s67 = sphi 0, %s64
    %s68 = sphi 0, %s67
    %s84 = sphi 0, %s68
    %s90 = sphi 0, %s92
    %s93 = sphi 0, %s90
    %s94 = sphi 0, %s93
    %s110 = sphi 0, %s94
    %s116 = sphi 0, %s118
    %s119 = sphi 0, %s116
    %s120 = sphi 0, %s119
    %s136 = sphi 0, %s120
    %s140 = sphi 0, %s140
    %s142 = sphi 0, %s140
    %s143 = sphi 0, %s142
    %s157 = sphi 0, %s143
    %s161 = sphi 0, %s161
    %s163 = sphi 0, %s161
    %s164 = sphi 0, %s163
    %s178 = sphi 0, %s164
    %s182 = sphi 0, %s182
    %s184 = sphi 0, %s182
    %s185 = sphi 0, %s184
    %s199 = sphi 0, %s185
    %s203 = sphi 0, %s203
    %s205 = sphi 0, %s203
    %s206 = sphi 0, %s205
    %s220 = sphi 0, %s206
    %s224 = sphi 0, %s224
    %s226 = sphi 0, %s224
    %s227 = sphi 0, %s226
    %s241 = sphi 0, %s227
    %s245 = sphi 0, %s245
    %s247 = sphi 0, %s245
    %s248 = sphi 0, %s247
    %s262 = sphi 0, %s248
    %s266 = sphi 0, %s266
    %s268 = sphi 0, %s266
    %s269 = sphi 0, %s268
    %s283 = sphi 0, %s269
    %s287 = sphi 0, %s287
    %s289 = sphi 0, %s287
    %s290 = sphi 0, %s289
    %s304 = sphi 0, %s290
    %s308 = sphi 0, %s308
    %s310 = sphi 0, %s308
    %s311 = sphi 0, %s310
    %s325 = sphi 0, %s311
    %s329 = sphi 0, %s329
    %s331 = sphi 0, %s329
    %s332 = sphi 0, %s331
    %s346 = sphi 0, %s332
    %s350 = sphi 0, %s350
    %s352 = sphi 0, %s350
    %s353 = sphi 0, %s352
    %s367 = sphi 0, %s353
    %s371 = sphi 0, %s371
    %s373 = sphi 0, %s371
    %s374 = sphi 0, %s373
    %s388 = sphi 0, %s374
    %s392 = sphi 0, %s392
    %s394 = sphi 0, %s392
    %s395 = sphi 0, %s394
    %s409 = sphi 0, %s395
    %s413 = sphi 0, %s413
    %s415 = sphi 0, %s413
    %s416 = sphi 0, %s415
    %s430 = sphi 0, %s416
    %s434 = sphi 0, %s434
    %s436 = sphi 0, %s434
    %s437 = sphi 0, %s436
    %s451 = sphi 0, %s437
    %s455 = sphi 0, %s455
    %s457 = sphi 0, %s455
    %s458 = sphi 0, %s457
    %s472 = sphi 0, %s458
    %s478 = sphi 0, %s480
    %s481 = sphi 0, %s478
    %s482 = sphi 0, %s481
    %s498 = sphi 0, %s482
  $region4: #{tpu_custom_call.1} parent=0 // loop_header_branch
    %31 = sbr.rel (%p29) target = $region8
  $region5: #{tpu_custom_call.1} parent=0 // loop_body
    %s33 = ssub.s32 %s28, 1
    %s34 = ssub.s32 %s28, 2
    %s35 = sadd.s32 %s28, 1
    %s36 = ssub.s32 %s28, %s35
    %p37 = scmp.eq.s32.totalorder %s36, 0
    %s39 = sadd.s32 %s38, 1
    %s40 = scalar_select %p37, %s38, %s39
    %p43 = pneg %p37
    %p44 = scmp.eq.s32.totalorder %s28, 1
    %p45 = por %p43, %p44
    %p46 = scmp.ne.s32.totalorder %s38, %s41
    %p47 = scmp.eq.s32.totalorder %s28, 0
    %p48 = por %p46, %p47
    %p49 = scmp.ne.s32.totalorder %s38, %s41
    %p50 = scmp.eq.s32.totalorder %s33, 1
    %p51 = por %p49, %p50
    %p52 = scmp.ne.s32.totalorder %s41, %s42
    %p53 = scmp.eq.s32.totalorder %s33, 0
    %p54 = por %p52, %p53
    %p55 = scmp.ne.s32.totalorder %s41, %s42
    %p56 = scmp.eq.s32.totalorder %s34, 1
    %p57 = por %p55, %p56
    %p59 = scmp.ne.s32.totalorder %s42, %s58
    %p60 = scmp.eq.s32.totalorder %s34, 0
    %p61 = por %p59, %p60
    %s62 = ssub.s32 %s28, %s35
    %p63 = scmp.eq.s32.totalorder %s62, 0
    %s65 = sadd.s32 %s64, 1
    %s66 = scalar_select %p63, %s64, %s65
    %p69 = pneg %p63
    %p70 = scmp.eq.s32.totalorder %s28, 1
    %p71 = por %p69, %p70
    %p72 = scmp.ne.s32.totalorder %s64, %s67
    %p73 = scmp.eq.s32.totalorder %s28, 0
    %p74 = por %p72, %p73
    %p75 = scmp.ne.s32.totalorder %s64, %s67
    %p76 = scmp.eq.s32.totalorder %s33, 1
    %p77 = por %p75, %p76
    %p78 = scmp.ne.s32.totalorder %s67, %s68
    %p79 = scmp.eq.s32.totalorder %s33, 0
    %p80 = por %p78, %p79
    %p81 = scmp.ne.s32.totalorder %s67, %s68
    %p82 = scmp.eq.s32.totalorder %s34, 1
    %p83 = por %p81, %p82
    %p85 = scmp.ne.s32.totalorder %s68, %s84
    %p86 = scmp.eq.s32.totalorder %s34, 0
    %p87 = por %p85, %p86
    %s88 = ssub.s32 %s28, %s35
    %p89 = scmp.eq.s32.totalorder %s88, 0
    %s91 = sadd.s32 %s90, 1
    %s92 = scalar_select %p89, %s90, %s91
    %p95 = pneg %p89
    %p96 = scmp.eq.s32.totalorder %s28, 1
    %p97 = por %p95, %p96
    %p98 = scmp.ne.s32.totalorder %s90, %s93
    %p99 = scmp.eq.s32.totalorder %s28, 0
    %p100 = por %p98, %p99
    %p101 = scmp.ne.s32.totalorder %s90, %s93
    %p102 = scmp.eq.s32.totalorder %s33, 1
    %p103 = por %p101, %p102
    %p104 = scmp.ne.s32.totalorder %s93, %s94
    %p105 = scmp.eq.s32.totalorder %s33, 0
    %p106 = por %p104, %p105
    %p107 = scmp.ne.s32.totalorder %s93, %s94
    %p108 = scmp.eq.s32.totalorder %s34, 1
    %p109 = por %p107, %p108
    %p111 = scmp.ne.s32.totalorder %s94, %s110
    %p112 = scmp.eq.s32.totalorder %s34, 0
    %p113 = por %p111, %p112
    %s114 = ssub.s32 %s28, %s35
    %p115 = scmp.eq.s32.totalorder %s114, 0
    %s117 = sadd.s32 %s116, 1
    %s118 = scalar_select %p115, %s116, %s117
    %p121 = pneg %p115
    %p122 = scmp.eq.s32.totalorder %s28, 1
    %p123 = por %p121, %p122
    %p124 = scmp.ne.s32.totalorder %s116, %s119
    %p125 = scmp.eq.s32.totalorder %s28, 0
    %p126 = por %p124, %p125
    %p127 = scmp.ne.s32.totalorder %s116, %s119
    %p128 = scmp.eq.s32.totalorder %s33, 1
    %p129 = por %p127, %p128
    %p130 = scmp.ne.s32.totalorder %s119, %s120
    %p131 = scmp.eq.s32.totalorder %s33, 0
    %p132 = por %p130, %p131
    %p133 = scmp.ne.s32.totalorder %s119, %s120
    %p134 = scmp.eq.s32.totalorder %s34, 1
    %p135 = por %p133, %p134
    %p137 = scmp.ne.s32.totalorder %s120, %s136
    %p138 = scmp.eq.s32.totalorder %s34, 0
    %p139 = por %p137, %p138
    %s141 = sadd.s32 %s140, 1
    %p144 = scmp.eq.s32.totalorder %s28, 1
    %p145 = scmp.ne.s32.totalorder %s140, %s142
    %p146 = scmp.eq.s32.totalorder %s28, 0
    %p147 = por %p145, %p146
    %p148 = scmp.ne.s32.totalorder %s140, %s142
    %p149 = scmp.eq.s32.totalorder %s33, 1
    %p150 = por %p148, %p149
    %p151 = scmp.ne.s32.totalorder %s142, %s143
    %p152 = scmp.eq.s32.totalorder %s33, 0
    %p153 = por %p151, %p152
    %p154 = scmp.ne.s32.totalorder %s142, %s143
    %p155 = scmp.eq.s32.totalorder %s34, 1
    %p156 = por %p154, %p155
    %p158 = scmp.ne.s32.totalorder %s143, %s157
    %p159 = scmp.eq.s32.totalorder %s34, 0
    %p160 = por %p158, %p159
    %s162 = sadd.s32 %s161, 1
    %p165 = scmp.eq.s32.totalorder %s28, 1
    %p166 = scmp.ne.s32.totalorder %s161, %s163
    %p167 = scmp.eq.s32.totalorder %s28, 0
    %p168 = por %p166, %p167
    %p169 = scmp.ne.s32.totalorder %s161, %s163
    %p170 = scmp.eq.s32.totalorder %s33, 1
    %p171 = por %p169, %p170
    %p172 = scmp.ne.s32.totalorder %s163, %s164
    %p173 = scmp.eq.s32.totalorder %s33, 0
    %p174 = por %p172, %p173
    %p175 = scmp.ne.s32.totalorder %s163, %s164
    %p176 = scmp.eq.s32.totalorder %s34, 1
    %p177 = por %p175, %p176
    %p179 = scmp.ne.s32.totalorder %s164, %s178
    %p180 = scmp.eq.s32.totalorder %s34, 0
    %p181 = por %p179, %p180
    %s183 = sadd.s32 %s182, 1
    %p186 = scmp.eq.s32.totalorder %s28, 1
    %p187 = scmp.ne.s32.totalorder %s182, %s184
    %p188 = scmp.eq.s32.totalorder %s28, 0
    %p189 = por %p187, %p188
    %p190 = scmp.ne.s32.totalorder %s182, %s184
    %p191 = scmp.eq.s32.totalorder %s33, 1
    %p192 = por %p190, %p191
    %p193 = scmp.ne.s32.totalorder %s184, %s185
    %p194 = scmp.eq.s32.totalorder %s33, 0
    %p195 = por %p193, %p194
    %p196 = scmp.ne.s32.totalorder %s184, %s185
    %p197 = scmp.eq.s32.totalorder %s34, 1
    %p198 = por %p196, %p197
    %p200 = scmp.ne.s32.totalorder %s185, %s199
    %p201 = scmp.eq.s32.totalorder %s34, 0
    %p202 = por %p200, %p201
    %s204 = sadd.s32 %s203, 1
    %p207 = scmp.eq.s32.totalorder %s28, 1
    %p208 = scmp.ne.s32.totalorder %s203, %s205
    %p209 = scmp.eq.s32.totalorder %s28, 0
    %p210 = por %p208, %p209
    %p211 = scmp.ne.s32.totalorder %s203, %s205
    %p212 = scmp.eq.s32.totalorder %s33, 1
    %p213 = por %p211, %p212
    %p214 = scmp.ne.s32.totalorder %s205, %s206
    %p215 = scmp.eq.s32.totalorder %s33, 0
    %p216 = por %p214, %p215
    %p217 = scmp.ne.s32.totalorder %s205, %s206
    %p218 = scmp.eq.s32.totalorder %s34, 1
    %p219 = por %p217, %p218
    %p221 = scmp.ne.s32.totalorder %s206, %s220
    %p222 = scmp.eq.s32.totalorder %s34, 0
    %p223 = por %p221, %p222
    %s225 = sadd.s32 %s224, 1
    %p228 = scmp.eq.s32.totalorder %s28, 1
    %p229 = scmp.ne.s32.totalorder %s224, %s226
    %p230 = scmp.eq.s32.totalorder %s28, 0
    %p231 = por %p229, %p230
    %p232 = scmp.ne.s32.totalorder %s224, %s226
    %p233 = scmp.eq.s32.totalorder %s33, 1
    %p234 = por %p232, %p233
    %p235 = scmp.ne.s32.totalorder %s226, %s227
    %p236 = scmp.eq.s32.totalorder %s33, 0
    %p237 = por %p235, %p236
    %p238 = scmp.ne.s32.totalorder %s226, %s227
    %p239 = scmp.eq.s32.totalorder %s34, 1
    %p240 = por %p238, %p239
    %p242 = scmp.ne.s32.totalorder %s227, %s241
    %p243 = scmp.eq.s32.totalorder %s34, 0
    %p244 = por %p242, %p243
    %s246 = sadd.s32 %s245, 1
    %p249 = scmp.eq.s32.totalorder %s28, 1
    %p250 = scmp.ne.s32.totalorder %s245, %s247
    %p251 = scmp.eq.s32.totalorder %s28, 0
    %p252 = por %p250, %p251
    %p253 = scmp.ne.s32.totalorder %s245, %s247
    %p254 = scmp.eq.s32.totalorder %s33, 1
    %p255 = por %p253, %p254
    %p256 = scmp.ne.s32.totalorder %s247, %s248
    %p257 = scmp.eq.s32.totalorder %s33, 0
    %p258 = por %p256, %p257
    %p259 = scmp.ne.s32.totalorder %s247, %s248
    %p260 = scmp.eq.s32.totalorder %s34, 1
    %p261 = por %p259, %p260
    %p263 = scmp.ne.s32.totalorder %s248, %s262
    %p264 = scmp.eq.s32.totalorder %s34, 0
    %p265 = por %p263, %p264
    %s267 = sadd.s32 %s266, 1
    %p270 = scmp.eq.s32.totalorder %s28, 1
    %p271 = scmp.ne.s32.totalorder %s266, %s268
    %p272 = scmp.eq.s32.totalorder %s28, 0
    %p273 = por %p271, %p272
    %p274 = scmp.ne.s32.totalorder %s266, %s268
    %p275 = scmp.eq.s32.totalorder %s33, 1
    %p276 = por %p274, %p275
    %p277 = scmp.ne.s32.totalorder %s268, %s269
    %p278 = scmp.eq.s32.totalorder %s33, 0
    %p279 = por %p277, %p278
    %p280 = scmp.ne.s32.totalorder %s268, %s269
    %p281 = scmp.eq.s32.totalorder %s34, 1
    %p282 = por %p280, %p281
    %p284 = scmp.ne.s32.totalorder %s269, %s283
    %p285 = scmp.eq.s32.totalorder %s34, 0
    %p286 = por %p284, %p285
    %s288 = sadd.s32 %s287, 1
    %p291 = scmp.eq.s32.totalorder %s28, 1
    %p292 = scmp.ne.s32.totalorder %s287, %s289
    %p293 = scmp.eq.s32.totalorder %s28, 0
    %p294 = por %p292, %p293
    %p295 = scmp.ne.s32.totalorder %s287, %s289
    %p296 = scmp.eq.s32.totalorder %s33, 1
    %p297 = por %p295, %p296
    %p298 = scmp.ne.s32.totalorder %s289, %s290
    %p299 = scmp.eq.s32.totalorder %s33, 0
    %p300 = por %p298, %p299
    %p301 = scmp.ne.s32.totalorder %s289, %s290
    %p302 = scmp.eq.s32.totalorder %s34, 1
    %p303 = por %p301, %p302
    %p305 = scmp.ne.s32.totalorder %s290, %s304
    %p306 = scmp.eq.s32.totalorder %s34, 0
    %p307 = por %p305, %p306
    %s309 = sadd.s32 %s308, 1
    %p312 = scmp.eq.s32.totalorder %s28, 1
    %p313 = scmp.ne.s32.totalorder %s308, %s310
    %p314 = scmp.eq.s32.totalorder %s28, 0
    %p315 = por %p313, %p314
    %p316 = scmp.ne.s32.totalorder %s308, %s310
    %p317 = scmp.eq.s32.totalorder %s33, 1
    %p318 = por %p316, %p317
    %p319 = scmp.ne.s32.totalorder %s310, %s311
    %p320 = scmp.eq.s32.totalorder %s33, 0
    %p321 = por %p319, %p320
    %p322 = scmp.ne.s32.totalorder %s310, %s311
    %p323 = scmp.eq.s32.totalorder %s34, 1
    %p324 = por %p322, %p323
    %p326 = scmp.ne.s32.totalorder %s311, %s325
    %p327 = scmp.eq.s32.totalorder %s34, 0
    %p328 = por %p326, %p327
    %s330 = sadd.s32 %s329, 1
    %p333 = scmp.eq.s32.totalorder %s28, 1
    %p334 = scmp.ne.s32.totalorder %s329, %s331
    %p335 = scmp.eq.s32.totalorder %s28, 0
    %p336 = por %p334, %p335
    %p337 = scmp.ne.s32.totalorder %s329, %s331
    %p338 = scmp.eq.s32.totalorder %s33, 1
    %p339 = por %p337, %p338
    %p340 = scmp.ne.s32.totalorder %s331, %s332
    %p341 = scmp.eq.s32.totalorder %s33, 0
    %p342 = por %p340, %p341
    %p343 = scmp.ne.s32.totalorder %s331, %s332
    %p344 = scmp.eq.s32.totalorder %s34, 1
    %p345 = por %p343, %p344
    %p347 = scmp.ne.s32.totalorder %s332, %s346
    %p348 = scmp.eq.s32.totalorder %s34, 0
    %p349 = por %p347, %p348
    %s351 = sadd.s32 %s350, 1
    %p354 = scmp.eq.s32.totalorder %s28, 1
    %p355 = scmp.ne.s32.totalorder %s350, %s352
    %p356 = scmp.eq.s32.totalorder %s28, 0
    %p357 = por %p355, %p356
    %p358 = scmp.ne.s32.totalorder %s350, %s352
    %p359 = scmp.eq.s32.totalorder %s33, 1
    %p360 = por %p358, %p359
    %p361 = scmp.ne.s32.totalorder %s352, %s353
    %p362 = scmp.eq.s32.totalorder %s33, 0
    %p363 = por %p361, %p362
    %p364 = scmp.ne.s32.totalorder %s352, %s353
    %p365 = scmp.eq.s32.totalorder %s34, 1
    %p366 = por %p364, %p365
    %p368 = scmp.ne.s32.totalorder %s353, %s367
    %p369 = scmp.eq.s32.totalorder %s34, 0
    %p370 = por %p368, %p369
    %s372 = sadd.s32 %s371, 1
    %p375 = scmp.eq.s32.totalorder %s28, 1
    %p376 = scmp.ne.s32.totalorder %s371, %s373
    %p377 = scmp.eq.s32.totalorder %s28, 0
    %p378 = por %p376, %p377
    %p379 = scmp.ne.s32.totalorder %s371, %s373
    %p380 = scmp.eq.s32.totalorder %s33, 1
    %p381 = por %p379, %p380
    %p382 = scmp.ne.s32.totalorder %s373, %s374
    %p383 = scmp.eq.s32.totalorder %s33, 0
    %p384 = por %p382, %p383
    %p385 = scmp.ne.s32.totalorder %s373, %s374
    %p386 = scmp.eq.s32.totalorder %s34, 1
    %p387 = por %p385, %p386
    %p389 = scmp.ne.s32.totalorder %s374, %s388
    %p390 = scmp.eq.s32.totalorder %s34, 0
    %p391 = por %p389, %p390
    %s393 = sadd.s32 %s392, 1
    %p396 = scmp.eq.s32.totalorder %s28, 1
    %p397 = scmp.ne.s32.totalorder %s392, %s394
    %p398 = scmp.eq.s32.totalorder %s28, 0
    %p399 = por %p397, %p398
    %p400 = scmp.ne.s32.totalorder %s392, %s394
    %p401 = scmp.eq.s32.totalorder %s33, 1
    %p402 = por %p400, %p401
    %p403 = scmp.ne.s32.totalorder %s394, %s395
    %p404 = scmp.eq.s32.totalorder %s33, 0
    %p405 = por %p403, %p404
    %p406 = scmp.ne.s32.totalorder %s394, %s395
    %p407 = scmp.eq.s32.totalorder %s34, 1
    %p408 = por %p406, %p407
    %p410 = scmp.ne.s32.totalorder %s395, %s409
    %p411 = scmp.eq.s32.totalorder %s34, 0
    %p412 = por %p410, %p411
    %s414 = sadd.s32 %s413, 1
    %p417 = scmp.eq.s32.totalorder %s28, 1
    %p418 = scmp.ne.s32.totalorder %s413, %s415
    %p419 = scmp.eq.s32.totalorder %s28, 0
    %p420 = por %p418, %p419
    %p421 = scmp.ne.s32.totalorder %s413, %s415
    %p422 = scmp.eq.s32.totalorder %s33, 1
    %p423 = por %p421, %p422
    %p424 = scmp.ne.s32.totalorder %s415, %s416
    %p425 = scmp.eq.s32.totalorder %s33, 0
    %p426 = por %p424, %p425
    %p427 = scmp.ne.s32.totalorder %s415, %s416
    %p428 = scmp.eq.s32.totalorder %s34, 1
    %p429 = por %p427, %p428
    %p431 = scmp.ne.s32.totalorder %s416, %s430
    %p432 = scmp.eq.s32.totalorder %s34, 0
    %p433 = por %p431, %p432
    %s435 = sadd.s32 %s434, 1
    %p438 = scmp.eq.s32.totalorder %s28, 1
    %p439 = scmp.ne.s32.totalorder %s434, %s436
    %p440 = scmp.eq.s32.totalorder %s28, 0
    %p441 = por %p439, %p440
    %p442 = scmp.ne.s32.totalorder %s434, %s436
    %p443 = scmp.eq.s32.totalorder %s33, 1
    %p444 = por %p442, %p443
    %p445 = scmp.ne.s32.totalorder %s436, %s437
    %p446 = scmp.eq.s32.totalorder %s33, 0
    %p447 = por %p445, %p446
    %p448 = scmp.ne.s32.totalorder %s436, %s437
    %p449 = scmp.eq.s32.totalorder %s34, 1
    %p450 = por %p448, %p449
    %p452 = scmp.ne.s32.totalorder %s437, %s451
    %p453 = scmp.eq.s32.totalorder %s34, 0
    %p454 = por %p452, %p453
    %s456 = sadd.s32 %s455, 1
    %p459 = scmp.eq.s32.totalorder %s28, 1
    %p460 = scmp.ne.s32.totalorder %s455, %s457
    %p461 = scmp.eq.s32.totalorder %s28, 0
    %p462 = por %p460, %p461
    %p463 = scmp.ne.s32.totalorder %s455, %s457
    %p464 = scmp.eq.s32.totalorder %s33, 1
    %p465 = por %p463, %p464
    %p466 = scmp.ne.s32.totalorder %s457, %s458
    %p467 = scmp.eq.s32.totalorder %s33, 0
    %p468 = por %p466, %p467
    %p469 = scmp.ne.s32.totalorder %s457, %s458
    %p470 = scmp.eq.s32.totalorder %s34, 1
    %p471 = por %p469, %p470
    %p473 = scmp.ne.s32.totalorder %s458, %s472
    %p474 = scmp.eq.s32.totalorder %s34, 0
    %p475 = por %p473, %p474
    %s476 = ssub.s32 %s28, %s35
    %p477 = scmp.eq.s32.totalorder %s476, 0
    %s479 = sadd.s32 %s478, 1
    %s480 = scalar_select %p477, %s478, %s479
    %p483 = pneg %p477
    %p484 = scmp.eq.s32.totalorder %s28, 1
    %p485 = por %p483, %p484
    %p486 = scmp.ne.s32.totalorder %s478, %s481
    %p487 = scmp.eq.s32.totalorder %s28, 0
    %p488 = por %p486, %p487
    %p489 = scmp.ne.s32.totalorder %s478, %s481
    %p490 = scmp.eq.s32.totalorder %s33, 1
    %p491 = por %p489, %p490
    %p492 = scmp.ne.s32.totalorder %s481, %s482
    %p493 = scmp.eq.s32.totalorder %s33, 0
    %p494 = por %p492, %p493
    %p495 = scmp.ne.s32.totalorder %s481, %s482
    %p496 = scmp.eq.s32.totalorder %s34, 1
    %p497 = por %p495, %p496
    %p499 = scmp.ne.s32.totalorder %s482, %s498
    %p500 = scmp.eq.s32.totalorder %s34, 0
    %p501 = por %p499, %p500
    %p502 = scmp.le.s32.totalorder 1, %s28
    %p503 = scmp.lt.s32.totalorder %s28, 3
    %p504 = pnand %p502, %p503
    %p505 = pneg %p504
    // Predicated region
    $region9: #{tpu_custom_call.1} parent=5 // pred_check
      _
    $region10: #{tpu_custom_call.1} parent=5 // pred_check_branch
      %507 = sbr.rel (%p504) target = $region12
    $region11: #{tpu_custom_call.1} parent=5 // pred_region
      %s508 = ssub.s32 %s28, 1
      // Predicated region
      $region13: #{tpu_custom_call.1} parent=11 // pred_check
        %p509 = pneg %p153
      $region14: #{tpu_custom_call.1} parent=11 // pred_check_branch
        %511 = sbr.rel (%p509) target = $region16
      $region15: #{tpu_custom_call.1} parent=11 // pred_region
        _
      $region16: #{tpu_custom_call.1} parent=11 // pred_fallthru
        _
      // Predicated region
      $region17: #{tpu_custom_call.1} parent=11 // pred_check
        %p512 = pneg %p174
      $region18: #{tpu_custom_call.1} parent=11 // pred_check_branch
        %514 = sbr.rel (%p512) target = $region20
      $region19: #{tpu_custom_call.1} parent=11 // pred_region
        _
      $region20: #{tpu_custom_call.1} parent=11 // pred_fallthru
        _
      // Predicated region
      $region21: #{tpu_custom_call.1} parent=11 // pred_check
        %p515 = pneg %p195
      $region22: #{tpu_custom_call.1} parent=11 // pred_check_branch
        %517 = sbr.rel (%p515) target = $region24
      $region23: #{tpu_custom_call.1} parent=11 // pred_region
        _
      $region24: #{tpu_custom_call.1} parent=11 // pred_fallthru
        _
      // Predicated region
      $region25: #{tpu_custom_call.1} parent=11 // pred_check
        %p518 = pneg %p216
      $region26: #{tpu_custom_call.1} parent=11 // pred_check_branch
        %520 = sbr.rel (%p518) target = $region28
      $region27: #{tpu_custom_call.1} parent=11 // pred_region
        _
      $region28: #{tpu_custom_call.1} parent=11 // pred_fallthru
        _
      // Predicated region
      $region29: #{tpu_custom_call.1} parent=11 // pred_check
        %p521 = pneg %p237
      $region30: #{tpu_custom_call.1} parent=11 // pred_check_branch
        %523 = sbr.rel (%p521) target = $region32
      $region31: #{tpu_custom_call.1} parent=11 // pred_region
        _
      $region32: #{tpu_custom_call.1} parent=11 // pred_fallthru
        _
      // Predicated region
      $region33: #{tpu_custom_call.1} parent=11 // pred_check
        %p524 = pneg %p258
      $region34: #{tpu_custom_call.1} parent=11 // pred_check_branch
        %526 = sbr.rel (%p524) target = $region36
      $region35: #{tpu_custom_call.1} parent=11 // pred_region
        _
      $region36: #{tpu_custom_call.1} parent=11 // pred_fallthru
        _
      // Predicated region
      $region37: #{tpu_custom_call.1} parent=11 // pred_check
        %p527 = pneg %p279
      $region38: #{tpu_custom_call.1} parent=11 // pred_check_branch
        %529 = sbr.rel (%p527) target = $region40
      $region39: #{tpu_custom_call.1} parent=11 // pred_region
        _
      $region40: #{tpu_custom_call.1} parent=11 // pred_fallthru
        _
      // Predicated region
      $region41: #{tpu_custom_call.1} parent=11 // pred_check
        %p530 = pneg %p300
      $region42: #{tpu_custom_call.1} parent=11 // pred_check_branch
        %532 = sbr.rel (%p530) target = $region44
      $region43: #{tpu_custom_call.1} parent=11 // pred_region
        _
      $region44: #{tpu_custom_call.1} parent=11 // pred_fallthru
        _
      // Predicated region
      $region45: #{tpu_custom_call.1} parent=11 // pred_check
        %p533 = pneg %p321
      $region46: #{tpu_custom_call.1} parent=11 // pred_check_branch
        %535 = sbr.rel (%p533) target = $region48
      $region47: #{tpu_custom_call.1} parent=11 // pred_region
        _
      $region48: #{tpu_custom_call.1} parent=11 // pred_fallthru
        _
      // Predicated region
      $region49: #{tpu_custom_call.1} parent=11 // pred_check
        %p536 = pneg %p342
      $region50: #{tpu_custom_call.1} parent=11 // pred_check_branch
        %538 = sbr.rel (%p536) target = $region52
      $region51: #{tpu_custom_call.1} parent=11 // pred_region
        _
      $region52: #{tpu_custom_call.1} parent=11 // pred_fallthru
        _
      // Predicated region
      $region53: #{tpu_custom_call.1} parent=11 // pred_check
        %p539 = pneg %p363
      $region54: #{tpu_custom_call.1} parent=11 // pred_check_branch
        %541 = sbr.rel (%p539) target = $region56
      $region55: #{tpu_custom_call.1} parent=11 // pred_region
        _
      $region56: #{tpu_custom_call.1} parent=11 // pred_fallthru
        _
      // Predicated region
      $region57: #{tpu_custom_call.1} parent=11 // pred_check
        %p542 = pneg %p384
      $region58: #{tpu_custom_call.1} parent=11 // pred_check_branch
        %544 = sbr.rel (%p542) target = $region60
      $region59: #{tpu_custom_call.1} parent=11 // pred_region
        _
      $region60: #{tpu_custom_call.1} parent=11 // pred_fallthru
        _
      // Predicated region
      $region61: #{tpu_custom_call.1} parent=11 // pred_check
        %p545 = pneg %p405
      $region62: #{tpu_custom_call.1} parent=11 // pred_check_branch
        %547 = sbr.rel (%p545) target = $region64
      $region63: #{tpu_custom_call.1} parent=11 // pred_region
        _
      $region64: #{tpu_custom_call.1} parent=11 // pred_fallthru
        _
      // Predicated region
      $region65: #{tpu_custom_call.1} parent=11 // pred_check
        %p548 = pneg %p426
      $region66: #{tpu_custom_call.1} parent=11 // pred_check_branch
        %550 = sbr.rel (%p548) target = $region68
      $region67: #{tpu_custom_call.1} parent=11 // pred_region
        _
      $region68: #{tpu_custom_call.1} parent=11 // pred_fallthru
        _
      // Predicated region
      $region69: #{tpu_custom_call.1} parent=11 // pred_check
        %p551 = pneg %p447
      $region70: #{tpu_custom_call.1} parent=11 // pred_check_branch
        %553 = sbr.rel (%p551) target = $region72
      $region71: #{tpu_custom_call.1} parent=11 // pred_region
        _
      $region72: #{tpu_custom_call.1} parent=11 // pred_fallthru
        _
      // Predicated region
      $region73: #{tpu_custom_call.1} parent=11 // pred_check
        %p554 = pneg %p468
      $region74: #{tpu_custom_call.1} parent=11 // pred_check_branch
        %556 = sbr.rel (%p554) target = $region76
      $region75: #{tpu_custom_call.1} parent=11 // pred_region
        _
      $region76: #{tpu_custom_call.1} parent=11 // pred_fallthru
        _
    $region12: #{tpu_custom_call.1} parent=5 // pred_fallthru
      _
    %p557 = scmp.lt.s32.totalorder %s28, 2
    // Predicated region
    $region77: #{tpu_custom_call.1} parent=5 // pred_check
      %p558 = pneg %p557
    $region78: #{tpu_custom_call.1} parent=5 // pred_check_branch
      %560 = sbr.rel (%p558) target = $region80
    $region79: #{tpu_custom_call.1} parent=5 // pred_region
      // Predicated region
      $region81: #{tpu_custom_call.1} parent=79 // pred_check
        %p561 = pneg %p48
      $region82: #{tpu_custom_call.1} parent=79 // pred_check_branch
        %563 = sbr.rel (%p561) target = $region84
      $region83: #{tpu_custom_call.1} parent=79 // pred_region
        %p564 = scmp.lt.s32.totalorder %s28, 1
        %s565 = scalar_select %p564, %s28, 1
        %s566 = smul.addr %s565, 8
        %s567 = scalar_lea.vmem %s0, %s566
      $region84: #{tpu_custom_call.1} parent=79 // pred_fallthru
        _
      // Predicated region
      $region85: #{tpu_custom_call.1} parent=79 // pred_check
        %p568 = pneg %p74
      $region86: #{tpu_custom_call.1} parent=79 // pred_check_branch
        %570 = sbr.rel (%p568) target = $region88
      $region87: #{tpu_custom_call.1} parent=79 // pred_region
        %p571 = scmp.lt.s32.totalorder %s28, 1
        %s572 = scalar_select %p571, %s28, 1
        %s573 = smul.addr %s572, 8
        %s574 = scalar_lea.vmem %s1, %s573
      $region88: #{tpu_custom_call.1} parent=79 // pred_fallthru
        _
      // Predicated region
      $region89: #{tpu_custom_call.1} parent=79 // pred_check
        %p575 = pneg %p100
      $region90: #{tpu_custom_call.1} parent=79 // pred_check_branch
        %577 = sbr.rel (%p575) target = $region92
      $region91: #{tpu_custom_call.1} parent=79 // pred_region
        %p578 = scmp.lt.s32.totalorder %s28, 1
        %s579 = scalar_select %p578, %s28, 1
        %s580 = smul.addr %s579, 8
        %s581 = scalar_lea.vmem %s2, %s580
      $region92: #{tpu_custom_call.1} parent=79 // pred_fallthru
        _
      // Predicated region
      $region93: #{tpu_custom_call.1} parent=79 // pred_check
        %p582 = pneg %p126
      $region94: #{tpu_custom_call.1} parent=79 // pred_check_branch
        %584 = sbr.rel (%p582) target = $region96
      $region95: #{tpu_custom_call.1} parent=79 // pred_region
        %p585 = scmp.lt.s32.totalorder %s28, 1
        %s586 = scalar_select %p585, %s28, 1
        %s587 = smul.addr %s586, 8
        %s588 = scalar_lea.vmem %s3, %s587
      $region96: #{tpu_custom_call.1} parent=79 // pred_fallthru
        _
    $region80: #{tpu_custom_call.1} parent=5 // pred_fallthru
      _
    %p589 = scmp.le.s32.totalorder 1, %s28
    %p590 = scmp.lt.s32.totalorder %s28, 3
    %p591 = pnand %p589, %p590
    %p592 = pneg %p591
    // Predicated region
    $region97: #{tpu_custom_call.1} parent=5 // pred_check
      _
    $region98: #{tpu_custom_call.1} parent=5 // pred_check_branch
      %594 = sbr.rel (%p591) target = $region100
    $region99: #{tpu_custom_call.1} parent=5 // pred_region
      %s595 = ssub.s32 %s28, 1
      %p596 = scmp.lt.s32.totalorder %s33, 1
      %s597 = scalar_select %p596, %s33, 1
      %s598 = smul.addr %s597, 8
      %s599 = scalar_lea.vmem %s0, %s598
      %p600 = pneg %p54
      %p601 = pneg %p51
      %p602 = scmp.lt.s32.totalorder %s33, 1
      %s603 = scalar_select %p602, %s33, 1
      %s604 = smul.addr %s603, 8
      %s605 = scalar_lea.vmem %s1, %s604
      %p606 = pneg %p80
      %p607 = pneg %p77
      %p608 = scmp.lt.s32.totalorder %s33, 1
      %s609 = scalar_select %p608, %s33, 1
      %s610 = smul.addr %s609, 8
      %s611 = scalar_lea.vmem %s2, %s610
      %p612 = pneg %p106
      %p613 = pneg %p103
      %p614 = scmp.lt.s32.totalorder %s33, 1
      %s615 = scalar_select %p614, %s33, 1
      %s616 = smul.addr %s615, 8
      %s617 = scalar_lea.vmem %s3, %s616
      %p618 = pneg %p132
      %p619 = pneg %p129
      %p620 = pneg %p153
      %p621 = pneg %p150
      %p622 = pneg %p174
      %p623 = pneg %p171
      %p624 = pneg %p195
      %p625 = pneg %p192
      %p626 = pneg %p216
      %p627 = pneg %p213
      %p628 = pneg %p237
      %p629 = pneg %p234
      %p630 = pneg %p258
      %p631 = pneg %p255
      %p632 = pneg %p279
      %p633 = pneg %p276
      %p634 = pneg %p300
      %p635 = pneg %p297
      %p636 = pneg %p321
      %p637 = pneg %p318
      %p638 = pneg %p342
      %p639 = pneg %p339
      %p640 = pneg %p363
      %p641 = pneg %p360
      %p642 = pneg %p384
      %p643 = pneg %p381
      %p644 = pneg %p405
      %p645 = pneg %p402
      %p646 = pneg %p426
      %p647 = pneg %p423
      %p648 = pneg %p447
      %p649 = pneg %p444
      %p650 = pneg %p468
      %p651 = pneg %p465
      %p652 = pneg %p494
      %p653 = pneg %p491
      %p654 = scmp.lt.s32.totalorder %s33, 1
      %s655 = scalar_select %p654, %s33, 1
      %s656 = scalar_lea.vmem %s20, %s655
      %p657 = scmp.lt.s32.totalorder %s33, 1
      %s658 = scalar_select %p657, %s33, 1
      %s659 = smul.addr %s658, 8
      %s660 = scalar_lea.vmem %s0, %s659
      %p661 = scmp.lt.s32.totalorder %s33, 1
      %s662 = scalar_select %p661, %s33, 1
      %s663 = smul.addr %s662, 8
      %s664 = scalar_lea.vmem %s1, %s663
      %p665 = scmp.lt.s32.totalorder %s33, 1
      %s666 = scalar_select %p665, %s33, 1
      %s667 = smul.addr %s666, 8
      %s668 = scalar_lea.vmem %s2, %s667
      %p669 = scmp.lt.s32.totalorder %s33, 1
      %s670 = scalar_select %p669, %s33, 1
      %s671 = smul.addr %s670, 8
      %s672 = scalar_lea.vmem %s3, %s671
      %p673 = scmp.lt.s32.totalorder %s33, 1
      %s674 = scalar_select %p673, %s33, 1
      %s675 = scalar_lea.vmem %s20, %s674
      %v676 = vld [vmem:[%s660] sm:$0xff]
      %v677 = vld [vmem:[%s668] sm:$0xff]
      %vm678 = vcmask 64512
      %v679 = vsel %vm678, %v676, 0.0
      %680 = vadd.xlane.f32.xlu0 %v679
      %v681 = vpop.xlane.xlu0 %680
      %v682 = vadd.f32 %v681, 1.0
      %vm683 = vcmp.gt.f32.partialorder %v682, 0.0
      %v684 = vrsqrt.pop %v682
      %v685 = vsel %vm683, %v684, 0.0
      %v686 = vmul.f32 %v685, %v677
      %v688 = vsel %vm678, %v676, 0
      %690 = vmatprep.subr.mxu0 0.0
      %691 = vmatpush1.msra.mxu0 %v686
      %692 = vmatprep.subr.mxu0 0.0
      %693 = vmatpush1.msra.mxu0 0.0
      %694 = vmatprep.subr.mxu0 0.0
      %695 = vmatpush1.msra.mxu0 0.0
      %696 = vmatprep.subr.mxu0 0.0
      %697 = vmatpush1.msra.mxu0 0.0
      %698 = vmatprep.subr.mxu0 0.0
      %699 = vmatpush1.msra.mxu0 0.0
      %700 = vmatprep.subr.mxu0 0.0
      %701 = vmatpush1.msra.mxu0 0.0
      %702 = vmatprep.subr.mxu0 0.0
      %703 = vmatpush1.msra.mxu0 0.0
      %704 = vmatprep.subr.mxu0 0.0
      %705 = vmatpush1.msra.mxu0 0.0
      %706 = vmatprep.subr.mxu0 0.0
      %707 = vmatpush1.msra.mxu0 0.0
      %708 = vmatprep.subr.mxu0 0.0
      %709 = vmatpush1.msra.mxu0 0.0
      %710 = vmatprep.subr.mxu0 0.0
      %711 = vmatpush1.msra.mxu0 0.0
      %712 = vmatprep.subr.mxu0 0.0
      %713 = vmatpush1.msra.mxu0 0.0
      %714 = vmatprep.subr.mxu0 0.0
      %715 = vmatpush1.msra.mxu0 0.0
      %716 = vmatprep.subr.mxu0 0.0
      %717 = vmatpush1.msra.mxu0 0.0
      %718 = vmatprep.subr.mxu0 0.0
      %719 = vmatpush1.msra.mxu0 0.0
      %720 = vmatprep.subr.mxu0 0.0
      %721 = vmatpush1.msra.mxu0 0.0
      %722 = vmatprep.subr.mxu0 0.0
      %723 = vmatpush1.msra.mxu0 0.0
      %724 = vmatprep.subr.mxu0 0.0
      %725 = vmatpush1.msra.mxu0 0.0
      %726 = vmatprep.subr.mxu0 0.0
      %727 = vmatpush1.msra.mxu0 0.0
      %728 = vmatprep.subr.mxu0 0.0
      %729 = vmatpush1.msra.mxu0 0.0
      %730 = vmatprep.subr.mxu0 0.0
      %731 = vmatpush1.msra.mxu0 0.0
      %732 = vmatprep.subr.mxu0 0.0
      %733 = vmatpush1.msra.mxu0 0.0
      %734 = vmatprep.subr.mxu0 0.0
      %735 = vmatpush1.msra.mxu0 0.0
      %736 = vmatprep.subr.mxu0 0.0
      %737 = vmatpush1.msra.mxu0 0.0
      %738 = vmatprep.subr.mxu0 0.0
      %739 = vmatpush1.msra.mxu0 0.0
      %740 = vmatprep.subr.mxu0 0.0
      %741 = vmatpush1.msra.mxu0 0.0
      %742 = vmatprep.subr.mxu0 0.0
      %743 = vmatpush1.msra.mxu0 0.0
      %744 = vmatprep.subr.mxu0 0.0
      %745 = vmatpush1.msra.mxu0 0.0
      %746 = vmatprep.subr.mxu0 0.0
      %747 = vmatpush1.msra.mxu0 0.0
      %748 = vmatprep.subr.mxu0 0.0
      %749 = vmatpush1.msra.mxu0 0.0
      %750 = vmatprep.subr.mxu0 0.0
      %751 = vmatpush1.msra.mxu0 0.0
      %752 = vmatprep.subr.mxu0 0.0
      %753 = vmatpush1.msra.mxu0 0.0
      %754 = vmatprep.mubr.f32.mxu0 0.0
      %755 = vmatmul.mubr.f32.gmra.mrb[0].mxu0 %v688
      %v756 = vpop.f32.mrb[0].mxu0
      %v757 = vadd.f32 %v686, %v756
      %v758 = vpop.f32.mrb[0].mxu0
      %759 = vdwg.mxu0
      %v760 = vmul.f32 %v685, %v757
      %v761 = vld [vmem:[%s664] sm:$0xff]
      %v762 = vld [vmem:[%s672] sm:$0xff]
      %v763 = vsel %vm678, %v761, 0.0
      %764 = vadd.xlane.f32.xlu0 %v763
      %v765 = vpop.xlane.xlu0 %764
      %v766 = vadd.f32 %v765, 1.0
      %vm767 = vcmp.gt.f32.partialorder %v766, 0.0
      %v768 = vrsqrt.pop %v766
      %v769 = vsel %vm767, %v768, 0.0
      %v770 = vmul.f32 %v769, %v762
      %v772 = vsel %vm678, %v761, 0
      %774 = vmatprep.subr.mxu0 0.0
      %775 = vmatpush1.msra.mxu0 %v770
      %776 = vmatprep.subr.mxu0 0.0
      %777 = vmatpush1.msra.mxu0 0.0
      %778 = vmatprep.subr.mxu0 0.0
      %779 = vmatpush1.msra.mxu0 0.0
      %780 = vmatprep.subr.mxu0 0.0
      %781 = vmatpush1.msra.mxu0 0.0
      %782 = vmatprep.subr.mxu0 0.0
      %783 = vmatpush1.msra.mxu0 0.0
      %784 = vmatprep.subr.mxu0 0.0
      %785 = vmatpush1.msra.mxu0 0.0
      %786 = vmatprep.subr.mxu0 0.0
      %787 = vmatpush1.msra.mxu0 0.0
      %788 = vmatprep.subr.mxu0 0.0
      %789 = vmatpush1.msra.mxu0 0.0
      %790 = vmatprep.subr.mxu0 0.0
      %791 = vmatpush1.msra.mxu0 0.0
      %792 = vmatprep.subr.mxu0 0.0
      %793 = vmatpush1.msra.mxu0 0.0
      %794 = vmatprep.subr.mxu0 0.0
      %795 = vmatpush1.msra.mxu0 0.0
      %796 = vmatprep.subr.mxu0 0.0
      %797 = vmatpush1.msra.mxu0 0.0
      %798 = vmatprep.subr.mxu0 0.0
      %799 = vmatpush1.msra.mxu0 0.0
      %800 = vmatprep.subr.mxu0 0.0
      %801 = vmatpush1.msra.mxu0 0.0
      %802 = vmatprep.subr.mxu0 0.0
      %803 = vmatpush1.msra.mxu0 0.0
      %804 = vmatprep.subr.mxu0 0.0
      %805 = vmatpush1.msra.mxu0 0.0
      %806 = vmatprep.subr.mxu0 0.0
      %807 = vmatpush1.msra.mxu0 0.0
      %808 = vmatprep.subr.mxu0 0.0
      %809 = vmatpush1.msra.mxu0 0.0
      %810 = vmatprep.subr.mxu0 0.0
      %811 = vmatpush1.msra.mxu0 0.0
      %812 = vmatprep.subr.mxu0 0.0
      %813 = vmatpush1.msra.mxu0 0.0
      %814 = vmatprep.subr.mxu0 0.0
      %815 = vmatpush1.msra.mxu0 0.0
      %816 = vmatprep.subr.mxu0 0.0
      %817 = vmatpush1.msra.mxu0 0.0
      %818 = vmatprep.subr.mxu0 0.0
      %819 = vmatpush1.msra.mxu0 0.0
      %820 = vmatprep.subr.mxu0 0.0
      %821 = vmatpush1.msra.mxu0 0.0
      %822 = vmatprep.subr.mxu0 0.0
      %823 = vmatpush1.msra.mxu0 0.0
      %824 = vmatprep.subr.mxu0 0.0
      %825 = vmatpush1.msra.mxu0 0.0
      %826 = vmatprep.subr.mxu0 0.0
      %827 = vmatpush1.msra.mxu0 0.0
      %828 = vmatprep.subr.mxu0 0.0
      %829 = vmatpush1.msra.mxu0 0.0
      %830 = vmatprep.subr.mxu0 0.0
      %831 = vmatpush1.msra.mxu0 0.0
      %832 = vmatprep.subr.mxu0 0.0
      %833 = vmatpush1.msra.mxu0 0.0
      %834 = vmatprep.subr.mxu0 0.0
      %835 = vmatpush1.msra.mxu0 0.0
      %836 = vmatprep.subr.mxu0 0.0
      %837 = vmatpush1.msra.mxu0 0.0
      %838 = vmatprep.mubr.f32.mxu0 0.0
      %839 = vmatmul.mubr.f32.gmra.mrb[0].mxu0 %v772
      %v840 = vpop.f32.mrb[0].mxu0
      %v841 = vadd.f32 %v770, %v840
      %v842 = vpop.f32.mrb[0].mxu0
      %843 = vdwg.mxu0
      %v844 = vmul.f32 %v769, %v841
      %v845 = vld [vmem:[%s4] sm:$0xff]
      %v846 = vld [vmem:[%s4 + $0x8] sm:$0xff]
      %v847 = vld [vmem:[%s5] sm:$0x1]
      %v849 = vlaneseq
      %v850 = vshrl.u32 %v849, 7
      %v851 = vsub.s32 0, %v850
      %v852 = vrot.slane %v847, %v851
      %vm854 = vcmask 130048
      %v856 = vsel %vm854, %v760, 0
      %v859 = vsel %vm854, %v844, 0
      %861 = vmatprep.subr.mxu0 0.0
      %862 = vmatpush1.msra.mxu0 %v845
      %863 = vmatprep.subr.mxu0 0.0
      %864 = vmatpush1.msra.mxu0 %v846
      %865 = vmatprep.subr.mxu0 0.0
      %866 = vmatpush1.msra.mxu0 0.0
      %867 = vmatprep.subr.mxu0 0.0
      %868 = vmatpush1.msra.mxu0 0.0
      %869 = vmatprep.subr.mxu0 0.0
      %870 = vmatpush1.msra.mxu0 0.0
      %871 = vmatprep.subr.mxu0 0.0
      %872 = vmatpush1.msra.mxu0 0.0
      %873 = vmatprep.subr.mxu0 0.0
      %874 = vmatpush1.msra.mxu0 0.0
      %875 = vmatprep.subr.mxu0 0.0
      %876 = vmatpush1.msra.mxu0 0.0
      %877 = vmatprep.subr.mxu0 0.0
      %878 = vmatpush1.msra.mxu0 0.0
      %879 = vmatprep.subr.mxu0 0.0
      %880 = vmatpush1.msra.mxu0 0.0
      %881 = vmatprep.subr.mxu0 0.0
      %882 = vmatpush1.msra.mxu0 0.0
      %883 = vmatprep.subr.mxu0 0.0
      %884 = vmatpush1.msra.mxu0 0.0
      %885 = vmatprep.subr.mxu0 0.0
      %886 = vmatpush1.msra.mxu0 0.0
      %887 = vmatprep.subr.mxu0 0.0
      %888 = vmatpush1.msra.mxu0 0.0
      %889 = vmatprep.subr.mxu0 0.0
      %890 = vmatpush1.msra.mxu0 0.0
      %891 = vmatprep.subr.mxu0 0.0
      %892 = vmatpush1.msra.mxu0 0.0
      %893 = vmatprep.subr.mxu0 0.0
      %894 = vmatpush1.msra.mxu0 0.0
      %895 = vmatprep.subr.mxu0 0.0
      %896 = vmatpush1.msra.mxu0 0.0
      %897 = vmatprep.subr.mxu0 0.0
      %898 = vmatpush1.msra.mxu0 0.0
      %899 = vmatprep.subr.mxu0 0.0
      %900 = vmatpush1.msra.mxu0 0.0
      %901 = vmatprep.subr.mxu0 0.0
      %902 = vmatpush1.msra.mxu0 0.0
      %903 = vmatprep.subr.mxu0 0.0
      %904 = vmatpush1.msra.mxu0 0.0
      %905 = vmatprep.subr.mxu0 0.0
      %906 = vmatpush1.msra.mxu0 0.0
      %907 = vmatprep.subr.mxu0 0.0
      %908 = vmatpush1.msra.mxu0 0.0
      %909 = vmatprep.subr.mxu0 0.0
      %910 = vmatpush1.msra.mxu0 0.0
      %911 = vmatprep.subr.mxu0 0.0
      %912 = vmatpush1.msra.mxu0 0.0
      %913 = vmatprep.subr.mxu0 0.0
      %914 = vmatpush1.msra.mxu0 0.0
      %915 = vmatprep.subr.mxu0 0.0
      %916 = vmatpush1.msra.mxu0 0.0
      %917 = vmatprep.subr.mxu0 0.0
      %918 = vmatpush1.msra.mxu0 0.0
      %919 = vmatprep.subr.mxu0 0.0
      %920 = vmatpush1.msra.mxu0 0.0
      %921 = vmatprep.subr.mxu0 0.0
      %922 = vmatpush1.msra.mxu0 0.0
      %923 = vmatprep.subr.mxu0 0.0
      %924 = vmatpush1.msra.mxu0 0.0
      %925 = vmatprep.mubr.f32.mxu0 0.0
      %926 = vmatmul.mubr.f32.gmra.mrb[0].mxu0 %v856
      %v927 = vpop.f32.mrb[0].mxu0
      %v928 = vadd.f32 %v852, %v927
      %v929 = vpop.f32.mrb[0].mxu0
      %930 = vmatprep.mubr.f32.mxu0 0.0
      %931 = vmatmul.mubr.f32.gmra.mrb[0].mxu0 %v859
      %v932 = vpop.f32.mrb[0].mxu0
      %v933 = vadd.f32 %v852, %v932
      %v934 = vpop.f32.mrb[0].mxu0
      %935 = vdwg.mxu0
      %v936 = vmax.f32 %v928, 0.0
      %v937 = vmax.f32 %v933, 0.0
      %v938 = vld [vmem:[%s6] sm:$0xff]
      %v939 = vld [vmem:[%s6 + $0x8] sm:$0xff]
      %v940 = vld [vmem:[%s6 + $0x10] sm:$0xff]
      %v941 = vld [vmem:[%s6 + $0x18] sm:$0xff]
      %v942 = vld [vmem:[%s7] sm:$0x1]
      %v944 = vlaneseq
      %v945 = vshrl.u32 %v944, 7
      %v946 = vsub.s32 0, %v945
      %v947 = vrot.slane %v942, %v946
      %vm949 = vcmask 261120
      %v951 = vsel %vm949, %v936, 0
      %953 = vmatprep.subr.mxu0 0.0
      %954 = vmatpush1.msra.mxu0 %v938
      %955 = vmatprep.subr.mxu0 0.0
      %956 = vmatpush1.msra.mxu0 %v939
      %957 = vmatprep.subr.mxu0 0.0
      %958 = vmatpush1.msra.mxu0 %v940
      %959 = vmatprep.subr.mxu0 0.0
      %960 = vmatpush1.msra.mxu0 %v941
      %961 = vmatprep.subr.mxu0 0.0
      %962 = vmatpush1.msra.mxu0 0.0
      %963 = vmatprep.subr.mxu0 0.0
      %964 = vmatpush1.msra.mxu0 0.0
      %965 = vmatprep.subr.mxu0 0.0
      %966 = vmatpush1.msra.mxu0 0.0
      %967 = vmatprep.subr.mxu0 0.0
      %968 = vmatpush1.msra.mxu0 0.0
      %969 = vmatprep.subr.mxu0 0.0
      %970 = vmatpush1.msra.mxu0 0.0
      %971 = vmatprep.subr.mxu0 0.0
      %972 = vmatpush1.msra.mxu0 0.0
      %973 = vmatprep.subr.mxu0 0.0
      %974 = vmatpush1.msra.mxu0 0.0
      %975 = vmatprep.subr.mxu0 0.0
      %976 = vmatpush1.msra.mxu0 0.0
      %977 = vmatprep.subr.mxu0 0.0
      %978 = vmatpush1.msra.mxu0 0.0
      %979 = vmatprep.subr.mxu0 0.0
      %980 = vmatpush1.msra.mxu0 0.0
      %981 = vmatprep.subr.mxu0 0.0
      %982 = vmatpush1.msra.mxu0 0.0
      %983 = vmatprep.subr.mxu0 0.0
      %984 = vmatpush1.msra.mxu0 0.0
      %985 = vmatprep.subr.mxu0 0.0
      %986 = vmatpush1.msra.mxu0 0.0
      %987 = vmatprep.subr.mxu0 0.0
      %988 = vmatpush1.msra.mxu0 0.0
      %989 = vmatprep.subr.mxu0 0.0
      %990 = vmatpush1.msra.mxu0 0.0
      %991 = vmatprep.subr.mxu0 0.0
      %992 = vmatpush1.msra.mxu0 0.0
      %993 = vmatprep.subr.mxu0 0.0
      %994 = vmatpush1.msra.mxu0 0.0
      %995 = vmatprep.subr.mxu0 0.0
      %996 = vmatpush1.msra.mxu0 0.0
      %997 = vmatprep.subr.mxu0 0.0
      %998 = vmatpush1.msra.mxu0 0.0
      %999 = vmatprep.subr.mxu0 0.0
      %1000 = vmatpush1.msra.mxu0 0.0
      %1001 = vmatprep.subr.mxu0 0.0
      %1002 = vmatpush1.msra.mxu0 0.0
      %1003 = vmatprep.subr.mxu0 0.0
      %1004 = vmatpush1.msra.mxu0 0.0
      %1005 = vmatprep.subr.mxu0 0.0
      %1006 = vmatpush1.msra.mxu0 0.0
      %1007 = vmatprep.subr.mxu0 0.0
      %1008 = vmatpush1.msra.mxu0 0.0
      %1009 = vmatprep.subr.mxu0 0.0
      %1010 = vmatpush1.msra.mxu0 0.0
      %1011 = vmatprep.subr.mxu0 0.0
      %1012 = vmatpush1.msra.mxu0 0.0
      %1013 = vmatprep.subr.mxu0 0.0
      %1014 = vmatpush1.msra.mxu0 0.0
      %1015 = vmatprep.subr.mxu0 0.0
      %1016 = vmatpush1.msra.mxu0 0.0
      %1017 = vmatprep.mubr.f32.mxu0 0.0
      %1018 = vmatmul.mubr.f32.gmra.mrb[0].mxu0 %v951
      %v1019 = vpop.f32.mrb[0].mxu0
      %v1020 = vadd.f32 %v947, %v1019
      %v1021 = vpop.f32.mrb[0].mxu0
      %1022 = vdwg.mxu0
      %v1023 = vld [vmem:[%s8] sm:$0xff]
      %v1024 = vld [vmem:[%s8 + $0x8] sm:$0xff]
      %v1025 = vld [vmem:[%s8 + $0x10] sm:$0xff]
      %v1026 = vld [vmem:[%s8 + $0x18] sm:$0xff]
      %v1027 = vld [vmem:[%s9] sm:$0x1]
      %v1029 = vlaneseq
      %v1030 = vshrl.u32 %v1029, 7
      %v1031 = vsub.s32 0, %v1030
      %v1032 = vrot.slane %v1027, %v1031
      %v1035 = vsel %vm949, %v937, 0
      %1037 = vmatprep.subr.mxu0 0.0
      %1038 = vmatpush1.msra.mxu0 %v1023
      %1039 = vmatprep.subr.mxu0 0.0
      %1040 = vmatpush1.msra.mxu0 %v1024
      %1041 = vmatprep.subr.mxu0 0.0
      %1042 = vmatpush1.msra.mxu0 %v1025
      %1043 = vmatprep.subr.mxu0 0.0
      %1044 = vmatpush1.msra.mxu0 %v1026
      %1045 = vmatprep.subr.mxu0 0.0
      %1046 = vmatpush1.msra.mxu0 0.0
      %1047 = vmatprep.subr.mxu0 0.0
      %1048 = vmatpush1.msra.mxu0 0.0
      %1049 = vmatprep.subr.mxu0 0.0
      %1050 = vmatpush1.msra.mxu0 0.0
      %1051 = vmatprep.subr.mxu0 0.0
      %1052 = vmatpush1.msra.mxu0 0.0
      %1053 = vmatprep.subr.mxu0 0.0
      %1054 = vmatpush1.msra.mxu0 0.0
      %1055 = vmatprep.subr.mxu0 0.0
      %1056 = vmatpush1.msra.mxu0 0.0
      %1057 = vmatprep.subr.mxu0 0.0
      %1058 = vmatpush1.msra.mxu0 0.0
      %1059 = vmatprep.subr.mxu0 0.0
      %1060 = vmatpush1.msra.mxu0 0.0
      %1061 = vmatprep.subr.mxu0 0.0
      %1062 = vmatpush1.msra.mxu0 0.0
      %1063 = vmatprep.subr.mxu0 0.0
      %1064 = vmatpush1.msra.mxu0 0.0
      %1065 = vmatprep.subr.mxu0 0.0
      %1066 = vmatpush1.msra.mxu0 0.0
      %1067 = vmatprep.subr.mxu0 0.0
      %1068 = vmatpush1.msra.mxu0 0.0
      %1069 = vmatprep.subr.mxu0 0.0
      %1070 = vmatpush1.msra.mxu0 0.0
      %1071 = vmatprep.subr.mxu0 0.0
      %1072 = vmatpush1.msra.mxu0 0.0
      %1073 = vmatprep.subr.mxu0 0.0
      %1074 = vmatpush1.msra.mxu0 0.0
      %1075 = vmatprep.subr.mxu0 0.0
      %1076 = vmatpush1.msra.mxu0 0.0
      %1077 = vmatprep.subr.mxu0 0.0
      %1078 = vmatpush1.msra.mxu0 0.0
      %1079 = vmatprep.subr.mxu0 0.0
      %1080 = vmatpush1.msra.mxu0 0.0
      %1081 = vmatprep.subr.mxu0 0.0
      %1082 = vmatpush1.msra.mxu0 0.0
      %1083 = vmatprep.subr.mxu0 0.0
      %1084 = vmatpush1.msra.mxu0 0.0
      %1085 = vmatprep.subr.mxu0 0.0
      %1086 = vmatpush1.msra.mxu0 0.0
      %1087 = vmatprep.subr.mxu0 0.0
      %1088 = vmatpush1.msra.mxu0 0.0
      %1089 = vmatprep.subr.mxu0 0.0
      %1090 = vmatpush1.msra.mxu0 0.0
      %1091 = vmatprep.subr.mxu0 0.0
      %1092 = vmatpush1.msra.mxu0 0.0
      %1093 = vmatprep.subr.mxu0 0.0
      %1094 = vmatpush1.msra.mxu0 0.0
      %1095 = vmatprep.subr.mxu0 0.0
      %1096 = vmatpush1.msra.mxu0 0.0
      %1097 = vmatprep.subr.mxu0 0.0
      %1098 = vmatpush1.msra.mxu0 0.0
      %1099 = vmatprep.subr.mxu0 0.0
      %1100 = vmatpush1.msra.mxu0 0.0
      %1101 = vmatprep.mubr.f32.mxu0 0.0
      %1102 = vmatmul.mubr.f32.gmra.mrb[0].mxu0 %v1035
      %v1103 = vpop.f32.mrb[0].mxu0
      %v1104 = vadd.f32 %v1032, %v1103
      %v1105 = vpop.f32.mrb[0].mxu0
      %1106 = vdwg.mxu0
      %v1108 = vsel %vm949, %v1020, 0
      %v1111 = vsel %vm949, %v1104, 0
      %1113 = vmatprep.subr.mxu0 0.0
      %1114 = vmatpush1.xpose.msra.mxu0 %v1111
      %1115 = vmatprep.subr.mxu0 0.0
      %1116 = vmatpush1.xpose.msra.mxu0 0.0
      %1117 = vmatprep.subr.mxu0 0.0
      %1118 = vmatpush1.xpose.msra.mxu0 0.0
      %1119 = vmatprep.subr.mxu0 0.0
      %1120 = vmatpush1.xpose.msra.mxu0 0.0
      %1121 = vmatprep.subr.mxu0 0.0
      %1122 = vmatpush1.xpose.msra.mxu0 0.0
      %1123 = vmatprep.subr.mxu0 0.0
      %1124 = vmatpush1.xpose.msra.mxu0 0.0
      %1125 = vmatprep.subr.mxu0 0.0
      %1126 = vmatpush1.xpose.msra.mxu0 0.0
      %1127 = vmatprep.subr.mxu0 0.0
      %1128 = vmatpush1.xpose.msra.mxu0 0.0
      %1129 = vmatprep.subr.mxu0 0.0
      %1130 = vmatpush1.xpose.msra.mxu0 0.0
      %1131 = vmatprep.subr.mxu0 0.0
      %1132 = vmatpush1.xpose.msra.mxu0 0.0
      %1133 = vmatprep.subr.mxu0 0.0
      %1134 = vmatpush1.xpose.msra.mxu0 0.0
      %1135 = vmatprep.subr.mxu0 0.0
      %1136 = vmatpush1.xpose.msra.mxu0 0.0
      %1137 = vmatprep.subr.mxu0 0.0
      %1138 = vmatpush1.xpose.msra.mxu0 0.0
      %1139 = vmatprep.subr.mxu0 0.0
      %1140 = vmatpush1.xpose.msra.mxu0 0.0
      %1141 = vmatprep.subr.mxu0 0.0
      %1142 = vmatpush1.xpose.msra.mxu0 0.0
      %1143 = vmatprep.subr.mxu0 0.0
      %1144 = vmatpush1.xpose.msra.mxu0 0.0
      %1145 = vmatprep.subr.mxu0 0.0
      %1146 = vmatpush1.xpose.msra.mxu0 0.0
      %1147 = vmatprep.subr.mxu0 0.0
      %1148 = vmatpush1.xpose.msra.mxu0 0.0
      %1149 = vmatprep.subr.mxu0 0.0
      %1150 = vmatpush1.xpose.msra.mxu0 0.0
      %1151 = vmatprep.subr.mxu0 0.0
      %1152 = vmatpush1.xpose.msra.mxu0 0.0
      %1153 = vmatprep.subr.mxu0 0.0
      %1154 = vmatpush1.xpose.msra.mxu0 0.0
      %1155 = vmatprep.subr.mxu0 0.0
      %1156 = vmatpush1.xpose.msra.mxu0 0.0
      %1157 = vmatprep.subr.mxu0 0.0
      %1158 = vmatpush1.xpose.msra.mxu0 0.0
      %1159 = vmatprep.subr.mxu0 0.0
      %1160 = vmatpush1.xpose.msra.mxu0 0.0
      %1161 = vmatprep.subr.mxu0 0.0
      %1162 = vmatpush1.xpose.msra.mxu0 0.0
      %1163 = vmatprep.subr.mxu0 0.0
      %1164 = vmatpush1.xpose.msra.mxu0 0.0
      %1165 = vmatprep.subr.mxu0 0.0
      %1166 = vmatpush1.xpose.msra.mxu0 0.0
      %1167 = vmatprep.subr.mxu0 0.0
      %1168 = vmatpush1.xpose.msra.mxu0 0.0
      %1169 = vmatprep.subr.mxu0 0.0
      %1170 = vmatpush1.xpose.msra.mxu0 0.0
      %1171 = vmatprep.subr.mxu0 0.0
      %1172 = vmatpush1.xpose.msra.mxu0 0.0
      %1173 = vmatprep.subr.mxu0 0.0
      %1174 = vmatpush1.xpose.msra.mxu0 0.0
      %1175 = vmatprep.subr.mxu0 0.0
      %1176 = vmatpush1.xpose.msra.mxu0 0.0
      %1177 = vmatprep.mubr.f32.mxu0 0.0
      %1178 = vmatmul.mubr.f32.gmra.mrb[0].mxu0 %v1108
      %v1179 = vpop.f32.mrb[0].mxu0
      %v1180 = vadd.f32 0.0, %v1179
      %v1181 = vpop.f32.mrb[0].mxu0
      %1182 = vdwg.mxu0
      %v1183 = vmul.f32 %v1180, 0.5
      %v1184 = vtanh.pop %v1183
      %v1185 = vmul.f32 %v1184, 0.5
      %v1186 = vadd.f32 %v1185, 0.5
      %v1188 = vsel %vm678, %v1186, 0
      %1190 = vmatprep.subr.mxu0 0.0
      %1191 = vmatpush1.msra.mxu0 %v937
      %1192 = vmatprep.subr.mxu0 0.0
      %1193 = vmatpush1.msra.mxu0 0.0
      %1194 = vmatprep.subr.mxu0 0.0
      %1195 = vmatpush1.msra.mxu0 0.0
      %1196 = vmatprep.subr.mxu0 0.0
      %1197 = vmatpush1.msra.mxu0 0.0
      %1198 = vmatprep.subr.mxu0 0.0
      %1199 = vmatpush1.msra.mxu0 0.0
      %1200 = vmatprep.subr.mxu0 0.0
      %1201 = vmatpush1.msra.mxu0 0.0
      %1202 = vmatprep.subr.mxu0 0.0
      %1203 = vmatpush1.msra.mxu0 0.0
      %1204 = vmatprep.subr.mxu0 0.0
      %1205 = vmatpush1.msra.mxu0 0.0
      %1206 = vmatprep.subr.mxu0 0.0
      %1207 = vmatpush1.msra.mxu0 0.0
      %1208 = vmatprep.subr.mxu0 0.0
      %1209 = vmatpush1.msra.mxu0 0.0
      %1210 = vmatprep.subr.mxu0 0.0
      %1211 = vmatpush1.msra.mxu0 0.0
      %1212 = vmatprep.subr.mxu0 0.0
      %1213 = vmatpush1.msra.mxu0 0.0
      %1214 = vmatprep.subr.mxu0 0.0
      %1215 = vmatpush1.msra.mxu0 0.0
      %1216 = vmatprep.subr.mxu0 0.0
      %1217 = vmatpush1.msra.mxu0 0.0
      %1218 = vmatprep.subr.mxu0 0.0
      %1219 = vmatpush1.msra.mxu0 0.0
      %1220 = vmatprep.subr.mxu0 0.0
      %1221 = vmatpush1.msra.mxu0 0.0
      %1222 = vmatprep.subr.mxu0 0.0
      %1223 = vmatpush1.msra.mxu0 0.0
      %1224 = vmatprep.subr.mxu0 0.0
      %1225 = vmatpush1.msra.mxu0 0.0
      %1226 = vmatprep.subr.mxu0 0.0
      %1227 = vmatpush1.msra.mxu0 0.0
      %1228 = vmatprep.subr.mxu0 0.0
      %1229 = vmatpush1.msra.mxu0 0.0
      %1230 = vmatprep.subr.mxu0 0.0
      %1231 = vmatpush1.msra.mxu0 0.0
      %1232 = vmatprep.subr.mxu0 0.0
      %1233 = vmatpush1.msra.mxu0 0.0
      %1234 = vmatprep.subr.mxu0 0.0
      %1235 = vmatpush1.msra.mxu0 0.0
      %1236 = vmatprep.subr.mxu0 0.0
      %1237 = vmatpush1.msra.mxu0 0.0
      %1238 = vmatprep.subr.mxu0 0.0
      %1239 = vmatpush1.msra.mxu0 0.0
      %1240 = vmatprep.subr.mxu0 0.0
      %1241 = vmatpush1.msra.mxu0 0.0
      %1242 = vmatprep.subr.mxu0 0.0
      %1243 = vmatpush1.msra.mxu0 0.0
      %1244 = vmatprep.subr.mxu0 0.0
      %1245 = vmatpush1.msra.mxu0 0.0
      %1246 = vmatprep.subr.mxu0 0.0
      %1247 = vmatpush1.msra.mxu0 0.0
      %1248 = vmatprep.subr.mxu0 0.0
      %1249 = vmatpush1.msra.mxu0 0.0
      %1250 = vmatprep.subr.mxu0 0.0
      %1251 = vmatpush1.msra.mxu0 0.0
      %1252 = vmatprep.subr.mxu0 0.0
      %1253 = vmatpush1.msra.mxu0 0.0
      %1254 = vmatprep.mubr.f32.mxu0 0.0
      %1255 = vmatmul.mubr.f32.gmra.mrb[0].mxu0 %v1188
      %v1256 = vpop.f32.mrb[0].mxu0
      %v1257 = vadd.f32 0.0, %v1256
      %v1258 = vpop.f32.mrb[0].mxu0
      %1259 = vdwg.mxu0
      %v1260 = vmul.f32 %v936, %v1257
      %v1261 = vadd.f32 %v1260, %v1257
      %v1262 = vsub.f32 %v1261, %v936
      %v1263 = vmul.f32 %v1262, 0.5
      %v1264 = vsel %vm949, %v1263, 0.0
      %v1265 = vrot.slane %v1264, 4
      %v1266 = vadd.f32 %v1264, %v1265
      %v1267 = vrot.slane %v1266, 2
      %v1268 = vadd.f32 %v1266, %v1267
      %v1269 = vrot.slane %v1268, 1
      %v1270 = vadd.f32 %v1268, %v1269
      %v1271 = vmul.f32 %v1270, 0.125
      %v1272 = vsel %vm949, %v1257, 0.0
      %v1273 = vrot.slane %v1272, 4
      %v1274 = vadd.f32 %v1272, %v1273
      %v1275 = vrot.slane %v1274, 2
      %v1276 = vadd.f32 %v1274, %v1275
      %v1277 = vrot.slane %v1276, 1
      %v1278 = vadd.f32 %v1276, %v1277
      %v1279 = vmul.f32 %v1278, 0.125
      %v1280 = vld [vmem:[%s10] sm:$0xff]
      %v1281 = vld [vmem:[%s10 + $0x8] sm:$0xff]
      %v1282 = vld [vmem:[%s10 + $0x10] sm:$0xff]
      %v1283 = vld [vmem:[%s10 + $0x18] sm:$0xff]
      %v1284 = vld [vmem:[%s11] sm:$0xff]
      %v1285 = vld [vmem:[%s11 + $0x8] sm:$0xff]
      %v1286 = vld [vmem:[%s11 + $0x10] sm:$0xff]
      %v1287 = vld [vmem:[%s11 + $0x18] sm:$0xff]
      %v1289 = vsel %vm949, %v1279, 0
      %1291 = vmatprep.subr.mxu0 0.0
      %1292 = vmatpush1.msra.mxu0 %v1284
      %1293 = vmatprep.subr.mxu0 0.0
      %1294 = vmatpush1.msra.mxu0 %v1285
      %1295 = vmatprep.subr.mxu0 0.0
      %1296 = vmatpush1.msra.mxu0 %v1286
      %1297 = vmatprep.subr.mxu0 0.0
      %1298 = vmatpush1.msra.mxu0 %v1287
      %1299 = vmatprep.subr.mxu0 0.0
      %1300 = vmatpush1.msra.mxu0 0.0
      %1301 = vmatprep.subr.mxu0 0.0
      %1302 = vmatpush1.msra.mxu0 0.0
      %1303 = vmatprep.subr.mxu0 0.0
      %1304 = vmatpush1.msra.mxu0 0.0
      %1305 = vmatprep.subr.mxu0 0.0
      %1306 = vmatpush1.msra.mxu0 0.0
      %1307 = vmatprep.subr.mxu0 0.0
      %1308 = vmatpush1.msra.mxu0 0.0
      %1309 = vmatprep.subr.mxu0 0.0
      %1310 = vmatpush1.msra.mxu0 0.0
      %1311 = vmatprep.subr.mxu0 0.0
      %1312 = vmatpush1.msra.mxu0 0.0
      %1313 = vmatprep.subr.mxu0 0.0
      %1314 = vmatpush1.msra.mxu0 0.0
      %1315 = vmatprep.subr.mxu0 0.0
      %1316 = vmatpush1.msra.mxu0 0.0
      %1317 = vmatprep.subr.mxu0 0.0
      %1318 = vmatpush1.msra.mxu0 0.0
      %1319 = vmatprep.subr.mxu0 0.0
      %1320 = vmatpush1.msra.mxu0 0.0
      %1321 = vmatprep.subr.mxu0 0.0
      %1322 = vmatpush1.msra.mxu0 0.0
      %1323 = vmatprep.subr.mxu0 0.0
      %1324 = vmatpush1.msra.mxu0 0.0
      %1325 = vmatprep.subr.mxu0 0.0
      %1326 = vmatpush1.msra.mxu0 0.0
      %1327 = vmatprep.subr.mxu0 0.0
      %1328 = vmatpush1.msra.mxu0 0.0
      %1329 = vmatprep.subr.mxu0 0.0
      %1330 = vmatpush1.msra.mxu0 0.0
      %1331 = vmatprep.subr.mxu0 0.0
      %1332 = vmatpush1.msra.mxu0 0.0
      %1333 = vmatprep.subr.mxu0 0.0
      %1334 = vmatpush1.msra.mxu0 0.0
      %1335 = vmatprep.subr.mxu0 0.0
      %1336 = vmatpush1.msra.mxu0 0.0
      %1337 = vmatprep.subr.mxu0 0.0
      %1338 = vmatpush1.msra.mxu0 0.0
      %1339 = vmatprep.subr.mxu0 0.0
      %1340 = vmatpush1.msra.mxu0 0.0
      %1341 = vmatprep.subr.mxu0 0.0
      %1342 = vmatpush1.msra.mxu0 0.0
      %1343 = vmatprep.subr.mxu0 0.0
      %1344 = vmatpush1.msra.mxu0 0.0
      %1345 = vmatprep.subr.mxu0 0.0
      %1346 = vmatpush1.msra.mxu0 0.0
      %1347 = vmatprep.subr.mxu0 0.0
      %1348 = vmatpush1.msra.mxu0 0.0
      %1349 = vmatprep.subr.mxu0 0.0
      %1350 = vmatpush1.msra.mxu0 0.0
      %1351 = vmatprep.subr.mxu0 0.0
      %1352 = vmatpush1.msra.mxu0 0.0
      %1353 = vmatprep.subr.mxu0 0.0
      %1354 = vmatpush1.msra.mxu0 0.0
      %1355 = vmatprep.mubr.f32.mxu0 0.0
      %1356 = vmatmul.mubr.f32.gmra.mrb[0].mxu0 %v1289
      %v1357 = vpop.f32.mrb[0].mxu0
      %v1358 = vadd.f32 0.0, %v1357
      %v1359 = vpop.f32.mrb[0].mxu0
      %1360 = vdwg.mxu0
      %v1362 = vsel %vm949, %v1271, 0
      %1364 = vmatprep.subr.mxu0 0.0
      %1365 = vmatpush1.msra.mxu0 %v1280
      %1366 = vmatprep.subr.mxu0 0.0
      %1367 = vmatpush1.msra.mxu0 %v1281
      %1368 = vmatprep.subr.mxu0 0.0
      %1369 = vmatpush1.msra.mxu0 %v1282
      %1370 = vmatprep.subr.mxu0 0.0
      %1371 = vmatpush1.msra.mxu0 %v1283
      %1372 = vmatprep.subr.mxu0 0.0
      %1373 = vmatpush1.msra.mxu0 0.0
      %1374 = vmatprep.subr.mxu0 0.0
      %1375 = vmatpush1.msra.mxu0 0.0
      %1376 = vmatprep.subr.mxu0 0.0
      %1377 = vmatpush1.msra.mxu0 0.0
      %1378 = vmatprep.subr.mxu0 0.0
      %1379 = vmatpush1.msra.mxu0 0.0
      %1380 = vmatprep.subr.mxu0 0.0
      %1381 = vmatpush1.msra.mxu0 0.0
      %1382 = vmatprep.subr.mxu0 0.0
      %1383 = vmatpush1.msra.mxu0 0.0
      %1384 = vmatprep.subr.mxu0 0.0
      %1385 = vmatpush1.msra.mxu0 0.0
      %1386 = vmatprep.subr.mxu0 0.0
      %1387 = vmatpush1.msra.mxu0 0.0
      %1388 = vmatprep.subr.mxu0 0.0
      %1389 = vmatpush1.msra.mxu0 0.0
      %1390 = vmatprep.subr.mxu0 0.0
      %1391 = vmatpush1.msra.mxu0 0.0
      %1392 = vmatprep.subr.mxu0 0.0
      %1393 = vmatpush1.msra.mxu0 0.0
      %1394 = vmatprep.subr.mxu0 0.0
      %1395 = vmatpush1.msra.mxu0 0.0
      %1396 = vmatprep.subr.mxu0 0.0
      %1397 = vmatpush1.msra.mxu0 0.0
      %1398 = vmatprep.subr.mxu0 0.0
      %1399 = vmatpush1.msra.mxu0 0.0
      %1400 = vmatprep.subr.mxu0 0.0
      %1401 = vmatpush1.msra.mxu0 0.0
      %1402 = vmatprep.subr.mxu0 0.0
      %1403 = vmatpush1.msra.mxu0 0.0
      %1404 = vmatprep.subr.mxu0 0.0
      %1405 = vmatpush1.msra.mxu0 0.0
      %1406 = vmatprep.subr.mxu0 0.0
      %1407 = vmatpush1.msra.mxu0 0.0
      %1408 = vmatprep.subr.mxu0 0.0
      %1409 = vmatpush1.msra.mxu0 0.0
      %1410 = vmatprep.subr.mxu0 0.0
      %1411 = vmatpush1.msra.mxu0 0.0
      %1412 = vmatprep.subr.mxu0 0.0
      %1413 = vmatpush1.msra.mxu0 0.0
      %1414 = vmatprep.subr.mxu0 0.0
      %1415 = vmatpush1.msra.mxu0 0.0
      %1416 = vmatprep.subr.mxu0 0.0
      %1417 = vmatpush1.msra.mxu0 0.0
      %1418 = vmatprep.subr.mxu0 0.0
      %1419 = vmatpush1.msra.mxu0 0.0
      %1420 = vmatprep.subr.mxu0 0.0
      %1421 = vmatpush1.msra.mxu0 0.0
      %1422 = vmatprep.subr.mxu0 0.0
      %1423 = vmatpush1.msra.mxu0 0.0
      %1424 = vmatprep.subr.mxu0 0.0
      %1425 = vmatpush1.msra.mxu0 0.0
      %1426 = vmatprep.subr.mxu0 0.0
      %1427 = vmatpush1.msra.mxu0 0.0
      %1428 = vmatprep.mubr.f32.mxu0 0.0
      %1429 = vmatmul.mubr.f32.gmra.mrb[0].mxu0 %v1362
      %v1430 = vpop.f32.mrb[0].mxu0
      %v1431 = vadd.f32 %v1358, %v1430
      %v1432 = vpop.f32.mrb[0].mxu0
      %1433 = vdwg.mxu0
      %v1434 = vld [vmem:[%s12] sm:$0x1]
      %v1435 = vadd.f32 %v1431, %v1434
      %v1436 = vld [vmem:[%s13] sm:$0xff]
      %v1437 = vld [vmem:[%s13 + $0x8] sm:$0xff]
      %v1438 = vld [vmem:[%s13 + $0x10] sm:$0xff]
      %v1439 = vld [vmem:[%s13 + $0x18] sm:$0xff]
      %v1440 = vld [vmem:[%s13 + $0x20] sm:$0xff]
      %v1441 = vld [vmem:[%s13 + $0x28] sm:$0xff]
      %v1442 = vld [vmem:[%s13 + $0x30] sm:$0xff]
      %v1443 = vld [vmem:[%s13 + $0x38] sm:$0xff]
      %v1444 = vld [vmem:[%s13 + $0x40] sm:$0xff]
      %v1445 = vld [vmem:[%s13 + $0x48] sm:$0xff]
      %v1446 = vld [vmem:[%s13 + $0x50] sm:$0xff]
      %v1447 = vld [vmem:[%s13 + $0x58] sm:$0xff]
      %v1448 = vld [vmem:[%s13 + $0x60] sm:$0xff]
      %v1449 = vld [vmem:[%s13 + $0x68] sm:$0xff]
      %v1450 = vld [vmem:[%s13 + $0x70] sm:$0xff]
      %v1451 = vld [vmem:[%s13 + $0x78] sm:$0xff]
      %1452 = vmatprep.subr.mxu0 %v1437
      %1453 = vmatpush1.msra.mxu0 %v1436
      %1454 = vmatprep.subr.mxu0 %v1441
      %1455 = vmatpush1.msra.mxu0 %v1440
      %1456 = vmatprep.subr.mxu0 %v1445
      %1457 = vmatpush1.msra.mxu0 %v1444
      %1458 = vmatprep.subr.mxu0 %v1449
      %1459 = vmatpush1.msra.mxu0 %v1448
      %1460 = vmatprep.subr.mxu0 0.0
      %1461 = vmatpush1.msra.mxu0 0.0
      %1462 = vmatprep.subr.mxu0 0.0
      %1463 = vmatpush1.msra.mxu0 0.0
      %1464 = vmatprep.subr.mxu0 0.0
      %1465 = vmatpush1.msra.mxu0 0.0
      %1466 = vmatprep.subr.mxu0 0.0
      %1467 = vmatpush1.msra.mxu0 0.0
      %1468 = vmatprep.subr.mxu0 0.0
      %1469 = vmatpush1.msra.mxu0 0.0
      %1470 = vmatprep.subr.mxu0 0.0
      %1471 = vmatpush1.msra.mxu0 0.0
      %1472 = vmatprep.subr.mxu0 0.0
      %1473 = vmatpush1.msra.mxu0 0.0
      %1474 = vmatprep.subr.mxu0 0.0
      %1475 = vmatpush1.msra.mxu0 0.0
      %1476 = vmatprep.subr.mxu0 0.0
      %1477 = vmatpush1.msra.mxu0 0.0
      %1478 = vmatprep.subr.mxu0 0.0
      %1479 = vmatpush1.msra.mxu0 0.0
      %1480 = vmatprep.subr.mxu0 0.0
      %1481 = vmatpush1.msra.mxu0 0.0
      %1482 = vmatprep.subr.mxu0 0.0
      %1483 = vmatpush1.msra.mxu0 0.0
      %1484 = vmatprep.subr.mxu0 0.0
      %1485 = vmatpush1.msra.mxu0 0.0
      %1486 = vmatprep.subr.mxu0 0.0
      %1487 = vmatpush1.msra.mxu0 0.0
      %1488 = vmatprep.subr.mxu0 0.0
      %1489 = vmatpush1.msra.mxu0 0.0
      %1490 = vmatprep.subr.mxu0 0.0
      %1491 = vmatpush1.msra.mxu0 0.0
      %1492 = vmatprep.subr.mxu0 0.0
      %1493 = vmatpush1.msra.mxu0 0.0
      %1494 = vmatprep.subr.mxu0 0.0
      %1495 = vmatpush1.msra.mxu0 0.0
      %1496 = vmatprep.subr.mxu0 0.0
      %1497 = vmatpush1.msra.mxu0 0.0
      %1498 = vmatprep.subr.mxu0 0.0
      %1499 = vmatpush1.msra.mxu0 0.0
      %1500 = vmatprep.subr.mxu0 0.0
      %1501 = vmatpush1.msra.mxu0 0.0
      %1502 = vmatprep.subr.mxu0 0.0
      %1503 = vmatpush1.msra.mxu0 0.0
      %1504 = vmatprep.subr.mxu0 0.0
      %1505 = vmatpush1.msra.mxu0 0.0
      %1506 = vmatprep.subr.mxu0 0.0
      %1507 = vmatpush1.msra.mxu0 0.0
      %1508 = vmatprep.subr.mxu0 0.0
      %1509 = vmatpush1.msra.mxu0 0.0
      %1510 = vmatprep.subr.mxu0 0.0
      %1511 = vmatpush1.msra.mxu0 0.0
      %1512 = vmatprep.subr.mxu0 0.0
      %1513 = vmatpush1.msra.mxu0 0.0
      %1514 = vmatprep.subr.mxu0 0.0
      %1515 = vmatpush1.msra.mxu0 0.0
      %1516 = vmatprep.mubr.f32.mxu0 0.0
      %1517 = vmatmul.mubr.f32.gmra.mrb[0].mxu0 %v1362
      %v1518 = vpop.f32.mrb[0].mxu0
      %v1519 = vadd.f32 0.0, %v1518
      %v1520 = vpop.f32.mrb[0].mxu0
      %v1521 = vadd.f32 0.0, %v1520
      %1522 = vdwg.mxu0
      %1523 = vmatprep.subr.mxu0 %v1439
      %1524 = vmatpush1.msra.mxu0 %v1438
      %1525 = vmatprep.subr.mxu0 %v1443
      %1526 = vmatpush1.msra.mxu0 %v1442
      %1527 = vmatprep.subr.mxu0 %v1447
      %1528 = vmatpush1.msra.mxu0 %v1446
      %1529 = vmatprep.subr.mxu0 %v1451
      %1530 = vmatpush1.msra.mxu0 %v1450
      %1531 = vmatprep.subr.mxu0 0.0
      %1532 = vmatpush1.msra.mxu0 0.0
      %1533 = vmatprep.subr.mxu0 0.0
      %1534 = vmatpush1.msra.mxu0 0.0
      %1535 = vmatprep.subr.mxu0 0.0
      %1536 = vmatpush1.msra.mxu0 0.0
      %1537 = vmatprep.subr.mxu0 0.0
      %1538 = vmatpush1.msra.mxu0 0.0
      %1539 = vmatprep.subr.mxu0 0.0
      %1540 = vmatpush1.msra.mxu0 0.0
      %1541 = vmatprep.subr.mxu0 0.0
      %1542 = vmatpush1.msra.mxu0 0.0
      %1543 = vmatprep.subr.mxu0 0.0
      %1544 = vmatpush1.msra.mxu0 0.0
      %1545 = vmatprep.subr.mxu0 0.0
      %1546 = vmatpush1.msra.mxu0 0.0
      %1547 = vmatprep.subr.mxu0 0.0
      %1548 = vmatpush1.msra.mxu0 0.0
      %1549 = vmatprep.subr.mxu0 0.0
      %1550 = vmatpush1.msra.mxu0 0.0
      %1551 = vmatprep.subr.mxu0 0.0
      %1552 = vmatpush1.msra.mxu0 0.0
      %1553 = vmatprep.subr.mxu0 0.0
      %1554 = vmatpush1.msra.mxu0 0.0
      %1555 = vmatprep.subr.mxu0 0.0
      %1556 = vmatpush1.msra.mxu0 0.0
      %1557 = vmatprep.subr.mxu0 0.0
      %1558 = vmatpush1.msra.mxu0 0.0
      %1559 = vmatprep.subr.mxu0 0.0
      %1560 = vmatpush1.msra.mxu0 0.0
      %1561 = vmatprep.subr.mxu0 0.0
      %1562 = vmatpush1.msra.mxu0 0.0
      %1563 = vmatprep.subr.mxu0 0.0
      %1564 = vmatpush1.msra.mxu0 0.0
      %1565 = vmatprep.subr.mxu0 0.0
      %1566 = vmatpush1.msra.mxu0 0.0
      %1567 = vmatprep.subr.mxu0 0.0
      %1568 = vmatpush1.msra.mxu0 0.0
      %1569 = vmatprep.subr.mxu0 0.0
      %1570 = vmatpush1.msra.mxu0 0.0
      %1571 = vmatprep.subr.mxu0 0.0
      %1572 = vmatpush1.msra.mxu0 0.0
      %1573 = vmatprep.subr.mxu0 0.0
      %1574 = vmatpush1.msra.mxu0 0.0
      %1575 = vmatprep.subr.mxu0 0.0
      %1576 = vmatpush1.msra.mxu0 0.0
      %1577 = vmatprep.subr.mxu0 0.0
      %1578 = vmatpush1.msra.mxu0 0.0
      %1579 = vmatprep.subr.mxu0 0.0
      %1580 = vmatpush1.msra.mxu0 0.0
      %1581 = vmatprep.subr.mxu0 0.0
      %1582 = vmatpush1.msra.mxu0 0.0
      %1583 = vmatprep.subr.mxu0 0.0
      %1584 = vmatpush1.msra.mxu0 0.0
      %1585 = vmatprep.subr.mxu0 0.0
      %1586 = vmatpush1.msra.mxu0 0.0
      %1587 = vmatprep.mubr.f32.mxu0 0.0
      %1588 = vmatmul.mubr.f32.gmra.mrb[0].mxu0 %v1362
      %v1589 = vpop.f32.mrb[0].mxu0
      %v1590 = vadd.f32 0.0, %v1589
      %v1591 = vpop.f32.mrb[0].mxu0
      %v1592 = vadd.f32 0.0, %v1591
      %1593 = vdwg.mxu0
      %v1594 = vld [vmem:[%s14] sm:$0xff]
      %v1595 = vld [vmem:[%s14 + $0x8] sm:$0xff]
      %v1596 = vld [vmem:[%s14 + $0x10] sm:$0xff]
      %v1597 = vld [vmem:[%s14 + $0x18] sm:$0xff]
      %v1598 = vld [vmem:[%s14 + $0x20] sm:$0xff]
      %v1599 = vld [vmem:[%s14 + $0x28] sm:$0xff]
      %v1600 = vld [vmem:[%s14 + $0x30] sm:$0xff]
      %v1601 = vld [vmem:[%s14 + $0x38] sm:$0xff]
      %v1602 = vld [vmem:[%s14 + $0x40] sm:$0xff]
      %v1603 = vld [vmem:[%s14 + $0x48] sm:$0xff]
      %v1604 = vld [vmem:[%s14 + $0x50] sm:$0xff]
      %v1605 = vld [vmem:[%s14 + $0x58] sm:$0xff]
      %v1606 = vld [vmem:[%s14 + $0x60] sm:$0xff]
      %v1607 = vld [vmem:[%s14 + $0x68] sm:$0xff]
      %v1608 = vld [vmem:[%s14 + $0x70] sm:$0xff]
      %v1609 = vld [vmem:[%s14 + $0x78] sm:$0xff]
      %1610 = vmatprep.subr.mxu0 %v1595
      %1611 = vmatpush1.msra.mxu0 %v1594
      %1612 = vmatprep.subr.mxu0 %v1599
      %1613 = vmatpush1.msra.mxu0 %v1598
      %1614 = vmatprep.subr.mxu0 %v1603
      %1615 = vmatpush1.msra.mxu0 %v1602
      %1616 = vmatprep.subr.mxu0 %v1607
      %1617 = vmatpush1.msra.mxu0 %v1606
      %1618 = vmatprep.subr.mxu0 0.0
      %1619 = vmatpush1.msra.mxu0 0.0
      %1620 = vmatprep.subr.mxu0 0.0
      %1621 = vmatpush1.msra.mxu0 0.0
      %1622 = vmatprep.subr.mxu0 0.0
      %1623 = vmatpush1.msra.mxu0 0.0
      %1624 = vmatprep.subr.mxu0 0.0
      %1625 = vmatpush1.msra.mxu0 0.0
      %1626 = vmatprep.subr.mxu0 0.0
      %1627 = vmatpush1.msra.mxu0 0.0
      %1628 = vmatprep.subr.mxu0 0.0
      %1629 = vmatpush1.msra.mxu0 0.0
      %1630 = vmatprep.subr.mxu0 0.0
      %1631 = vmatpush1.msra.mxu0 0.0
      %1632 = vmatprep.subr.mxu0 0.0
      %1633 = vmatpush1.msra.mxu0 0.0
      %1634 = vmatprep.subr.mxu0 0.0
      %1635 = vmatpush1.msra.mxu0 0.0
      %1636 = vmatprep.subr.mxu0 0.0
      %1637 = vmatpush1.msra.mxu0 0.0
      %1638 = vmatprep.subr.mxu0 0.0
      %1639 = vmatpush1.msra.mxu0 0.0
      %1640 = vmatprep.subr.mxu0 0.0
      %1641 = vmatpush1.msra.mxu0 0.0
      %1642 = vmatprep.subr.mxu0 0.0
      %1643 = vmatpush1.msra.mxu0 0.0
      %1644 = vmatprep.subr.mxu0 0.0
      %1645 = vmatpush1.msra.mxu0 0.0
      %1646 = vmatprep.subr.mxu0 0.0
      %1647 = vmatpush1.msra.mxu0 0.0
      %1648 = vmatprep.subr.mxu0 0.0
      %1649 = vmatpush1.msra.mxu0 0.0
      %1650 = vmatprep.subr.mxu0 0.0
      %1651 = vmatpush1.msra.mxu0 0.0
      %1652 = vmatprep.subr.mxu0 0.0
      %1653 = vmatpush1.msra.mxu0 0.0
      %1654 = vmatprep.subr.mxu0 0.0
      %1655 = vmatpush1.msra.mxu0 0.0
      %1656 = vmatprep.subr.mxu0 0.0
      %1657 = vmatpush1.msra.mxu0 0.0
      %1658 = vmatprep.subr.mxu0 0.0
      %1659 = vmatpush1.msra.mxu0 0.0
      %1660 = vmatprep.subr.mxu0 0.0
      %1661 = vmatpush1.msra.mxu0 0.0
      %1662 = vmatprep.subr.mxu0 0.0
      %1663 = vmatpush1.msra.mxu0 0.0
      %1664 = vmatprep.subr.mxu0 0.0
      %1665 = vmatpush1.msra.mxu0 0.0
      %1666 = vmatprep.subr.mxu0 0.0
      %1667 = vmatpush1.msra.mxu0 0.0
      %1668 = vmatprep.subr.mxu0 0.0
      %1669 = vmatpush1.msra.mxu0 0.0
      %1670 = vmatprep.subr.mxu0 0.0
      %1671 = vmatpush1.msra.mxu0 0.0
      %1672 = vmatprep.subr.mxu0 0.0
      %1673 = vmatpush1.msra.mxu0 0.0
      %1674 = vmatprep.mubr.f32.mxu0 0.0
      %1675 = vmatmul.mubr.f32.gmra.mrb[0].mxu0 %v1289
      %v1676 = vpop.f32.mrb[0].mxu0
      %v1677 = vadd.f32 0.0, %v1676
      %v1678 = vpop.f32.mrb[0].mxu0
      %v1679 = vadd.f32 0.0, %v1678
      %1680 = vdwg.mxu0
      %1681 = vmatprep.subr.mxu0 %v1597
      %1682 = vmatpush1.msra.mxu0 %v1596
      %1683 = vmatprep.subr.mxu0 %v1601
      %1684 = vmatpush1.msra.mxu0 %v1600
      %1685 = vmatprep.subr.mxu0 %v1605
      %1686 = vmatpush1.msra.mxu0 %v1604
      %1687 = vmatprep.subr.mxu0 %v1609
      %1688 = vmatpush1.msra.mxu0 %v1608
      %1689 = vmatprep.subr.mxu0 0.0
      %1690 = vmatpush1.msra.mxu0 0.0
      %1691 = vmatprep.subr.mxu0 0.0
      %1692 = vmatpush1.msra.mxu0 0.0
      %1693 = vmatprep.subr.mxu0 0.0
      %1694 = vmatpush1.msra.mxu0 0.0
      %1695 = vmatprep.subr.mxu0 0.0
      %1696 = vmatpush1.msra.mxu0 0.0
      %1697 = vmatprep.subr.mxu0 0.0
      %1698 = vmatpush1.msra.mxu0 0.0
      %1699 = vmatprep.subr.mxu0 0.0
      %1700 = vmatpush1.msra.mxu0 0.0
      %1701 = vmatprep.subr.mxu0 0.0
      %1702 = vmatpush1.msra.mxu0 0.0
      %1703 = vmatprep.subr.mxu0 0.0
      %1704 = vmatpush1.msra.mxu0 0.0
      %1705 = vmatprep.subr.mxu0 0.0
      %1706 = vmatpush1.msra.mxu0 0.0
      %1707 = vmatprep.subr.mxu0 0.0
      %1708 = vmatpush1.msra.mxu0 0.0
      %1709 = vmatprep.subr.mxu0 0.0
      %1710 = vmatpush1.msra.mxu0 0.0
      %1711 = vmatprep.subr.mxu0 0.0
      %1712 = vmatpush1.msra.mxu0 0.0
      %1713 = vmatprep.subr.mxu0 0.0
      %1714 = vmatpush1.msra.mxu0 0.0
      %1715 = vmatprep.subr.mxu0 0.0
      %1716 = vmatpush1.msra.mxu0 0.0
      %1717 = vmatprep.subr.mxu0 0.0
      %1718 = vmatpush1.msra.mxu0 0.0
      %1719 = vmatprep.subr.mxu0 0.0
      %1720 = vmatpush1.msra.mxu0 0.0
      %1721 = vmatprep.subr.mxu0 0.0
      %1722 = vmatpush1.msra.mxu0 0.0
      %1723 = vmatprep.subr.mxu0 0.0
      %1724 = vmatpush1.msra.mxu0 0.0
      %1725 = vmatprep.subr.mxu0 0.0
      %1726 = vmatpush1.msra.mxu0 0.0
      %1727 = vmatprep.subr.mxu0 0.0
      %1728 = vmatpush1.msra.mxu0 0.0
      %1729 = vmatprep.subr.mxu0 0.0
      %1730 = vmatpush1.msra.mxu0 0.0
      %1731 = vmatprep.subr.mxu0 0.0
      %1732 = vmatpush1.msra.mxu0 0.0
      %1733 = vmatprep.subr.mxu0 0.0
      %1734 = vmatpush1.msra.mxu0 0.0
      %1735 = vmatprep.subr.mxu0 0.0
      %1736 = vmatpush1.msra.mxu0 0.0
      %1737 = vmatprep.subr.mxu0 0.0
      %1738 = vmatpush1.msra.mxu0 0.0
      %1739 = vmatprep.subr.mxu0 0.0
      %1740 = vmatpush1.msra.mxu0 0.0
      %1741 = vmatprep.subr.mxu0 0.0
      %1742 = vmatpush1.msra.mxu0 0.0
      %1743 = vmatprep.subr.mxu0 0.0
      %1744 = vmatpush1.msra.mxu0 0.0
      %1745 = vmatprep.mubr.f32.mxu0 0.0
      %1746 = vmatmul.mubr.f32.gmra.mrb[0].mxu0 %v1289
      %v1747 = vpop.f32.mrb[0].mxu0
      %v1748 = vadd.f32 0.0, %v1747
      %v1749 = vpop.f32.mrb[0].mxu0
      %v1750 = vadd.f32 0.0, %v1749
      %1751 = vdwg.mxu0
      %v1752 = vmul.f32 %v1519, %v1677
      %v1753 = vmul.f32 %v1521, %v1679
      %v1754 = vmul.f32 %v1590, %v1748
      %v1755 = vmul.f32 %v1592, %v1750
      %v1756 = vld [vmem:[%s15] sm:$0xff]
      %v1757 = vld [vmem:[%s15 + $0x8] sm:$0xff]
      %v1758 = vld [vmem:[%s15 + $0x10] sm:$0xff]
      %v1759 = vld [vmem:[%s15 + $0x18] sm:$0xff]
      %v1760 = vld [vmem:[%s15 + $0x20] sm:$0xff]
      %v1761 = vld [vmem:[%s15 + $0x28] sm:$0xff]
      %v1762 = vld [vmem:[%s15 + $0x30] sm:$0xff]
      %v1763 = vld [vmem:[%s15 + $0x38] sm:$0xff]
      %v1764 = vld [vmem:[%s15 + $0x40] sm:$0xff]
      %v1765 = vld [vmem:[%s15 + $0x48] sm:$0xff]
      %v1766 = vld [vmem:[%s15 + $0x50] sm:$0xff]
      %v1767 = vld [vmem:[%s15 + $0x58] sm:$0xff]
      %v1768 = vld [vmem:[%s15 + $0x60] sm:$0xff]
      %v1769 = vld [vmem:[%s15 + $0x68] sm:$0xff]
      %v1770 = vld [vmem:[%s15 + $0x70] sm:$0xff]
      %v1771 = vld [vmem:[%s15 + $0x78] sm:$0xff]
      %v1772 = vld [vmem:[%s15 + $0x80] sm:$0xff]
      %v1773 = vld [vmem:[%s15 + $0x88] sm:$0xff]
      %v1774 = vld [vmem:[%s15 + $0x90] sm:$0xff]
      %v1775 = vld [vmem:[%s15 + $0x98] sm:$0xff]
      %v1776 = vld [vmem:[%s15 + $0xa0] sm:$0xff]
      %v1777 = vld [vmem:[%s15 + $0xa8] sm:$0xff]
      %v1778 = vld [vmem:[%s15 + $0xb0] sm:$0xff]
      %v1779 = vld [vmem:[%s15 + $0xb8] sm:$0xff]
      %v1780 = vld [vmem:[%s15 + $0xc0] sm:$0xff]
      %v1781 = vld [vmem:[%s15 + $0xc8] sm:$0xff]
      %v1782 = vld [vmem:[%s15 + $0xd0] sm:$0xff]
      %v1783 = vld [vmem:[%s15 + $0xd8] sm:$0xff]
      %v1784 = vld [vmem:[%s15 + $0xe0] sm:$0xff]
      %v1785 = vld [vmem:[%s15 + $0xe8] sm:$0xff]
      %v1786 = vld [vmem:[%s15 + $0xf0] sm:$0xff]
      %v1787 = vld [vmem:[%s15 + $0xf8] sm:$0xff]
      %v1788 = vld [vmem:[%s15 + $0x100] sm:$0xff]
      %v1789 = vld [vmem:[%s15 + $0x108] sm:$0xff]
      %v1790 = vld [vmem:[%s15 + $0x110] sm:$0xff]
      %v1791 = vld [vmem:[%s15 + $0x118] sm:$0xff]
      %v1792 = vld [vmem:[%s15 + $0x120] sm:$0xff]
      %v1793 = vld [vmem:[%s15 + $0x128] sm:$0xff]
      %v1794 = vld [vmem:[%s15 + $0x130] sm:$0xff]
      %v1795 = vld [vmem:[%s15 + $0x138] sm:$0xff]
      %v1796 = vld [vmem:[%s15 + $0x140] sm:$0xff]
      %v1797 = vld [vmem:[%s15 + $0x148] sm:$0xff]
      %v1798 = vld [vmem:[%s15 + $0x150] sm:$0xff]
      %v1799 = vld [vmem:[%s15 + $0x158] sm:$0xff]
      %v1800 = vld [vmem:[%s15 + $0x160] sm:$0xff]
      %v1801 = vld [vmem:[%s15 + $0x168] sm:$0xff]
      %v1802 = vld [vmem:[%s15 + $0x170] sm:$0xff]
      %v1803 = vld [vmem:[%s15 + $0x178] sm:$0xff]
      %v1804 = vld [vmem:[%s15 + $0x180] sm:$0xff]
      %v1805 = vld [vmem:[%s15 + $0x188] sm:$0xff]
      %v1806 = vld [vmem:[%s15 + $0x190] sm:$0xff]
      %v1807 = vld [vmem:[%s15 + $0x198] sm:$0xff]
      %v1808 = vld [vmem:[%s15 + $0x1a0] sm:$0xff]
      %v1809 = vld [vmem:[%s15 + $0x1a8] sm:$0xff]
      %v1810 = vld [vmem:[%s15 + $0x1b0] sm:$0xff]
      %v1811 = vld [vmem:[%s15 + $0x1b8] sm:$0xff]
      %v1812 = vld [vmem:[%s15 + $0x1c0] sm:$0xff]
      %v1813 = vld [vmem:[%s15 + $0x1c8] sm:$0xff]
      %v1814 = vld [vmem:[%s15 + $0x1d0] sm:$0xff]
      %v1815 = vld [vmem:[%s15 + $0x1d8] sm:$0xff]
      %v1816 = vld [vmem:[%s15 + $0x1e0] sm:$0xff]
      %v1817 = vld [vmem:[%s15 + $0x1e8] sm:$0xff]
      %v1818 = vld [vmem:[%s15 + $0x1f0] sm:$0xff]
      %v1819 = vld [vmem:[%s15 + $0x1f8] sm:$0xff]
      %1820 = vmatprep.subr.mxu0 0.0
      %1821 = vmatpush1.msra.mxu0 %v1756
      %1822 = vmatprep.subr.mxu0 0.0
      %1823 = vmatpush1.msra.mxu0 %v1757
      %1824 = vmatprep.subr.mxu0 0.0
      %1825 = vmatpush1.msra.mxu0 %v1758
      %1826 = vmatprep.subr.mxu0 0.0
      %1827 = vmatpush1.msra.mxu0 %v1759
      %1828 = vmatprep.subr.mxu0 0.0
      %1829 = vmatpush1.msra.mxu0 %v1760
      %1830 = vmatprep.subr.mxu0 0.0
      %1831 = vmatpush1.msra.mxu0 %v1761
      %1832 = vmatprep.subr.mxu0 0.0
      %1833 = vmatpush1.msra.mxu0 %v1762
      %1834 = vmatprep.subr.mxu0 0.0
      %1835 = vmatpush1.msra.mxu0 %v1763
      %1836 = vmatprep.subr.mxu0 0.0
      %1837 = vmatpush1.msra.mxu0 %v1764
      %1838 = vmatprep.subr.mxu0 0.0
      %1839 = vmatpush1.msra.mxu0 %v1765
      %1840 = vmatprep.subr.mxu0 0.0
      %1841 = vmatpush1.msra.mxu0 %v1766
      %1842 = vmatprep.subr.mxu0 0.0
      %1843 = vmatpush1.msra.mxu0 %v1767
      %1844 = vmatprep.subr.mxu0 0.0
      %1845 = vmatpush1.msra.mxu0 %v1768
      %1846 = vmatprep.subr.mxu0 0.0
      %1847 = vmatpush1.msra.mxu0 %v1769
      %1848 = vmatprep.subr.mxu0 0.0
      %1849 = vmatpush1.msra.mxu0 %v1770
      %1850 = vmatprep.subr.mxu0 0.0
      %1851 = vmatpush1.msra.mxu0 %v1771
      %1852 = vmatprep.subr.mxu0 0.0
      %1853 = vmatpush1.msra.mxu0 %v1772
      %1854 = vmatprep.subr.mxu0 0.0
      %1855 = vmatpush1.msra.mxu0 %v1773
      %1856 = vmatprep.subr.mxu0 0.0
      %1857 = vmatpush1.msra.mxu0 %v1774
      %1858 = vmatprep.subr.mxu0 0.0
      %1859 = vmatpush1.msra.mxu0 %v1775
      %1860 = vmatprep.subr.mxu0 0.0
      %1861 = vmatpush1.msra.mxu0 %v1776
      %1862 = vmatprep.subr.mxu0 0.0
      %1863 = vmatpush1.msra.mxu0 %v1777
      %1864 = vmatprep.subr.mxu0 0.0
      %1865 = vmatpush1.msra.mxu0 %v1778
      %1866 = vmatprep.subr.mxu0 0.0
      %1867 = vmatpush1.msra.mxu0 %v1779
      %1868 = vmatprep.subr.mxu0 0.0
      %1869 = vmatpush1.msra.mxu0 %v1780
      %1870 = vmatprep.subr.mxu0 0.0
      %1871 = vmatpush1.msra.mxu0 %v1781
      %1872 = vmatprep.subr.mxu0 0.0
      %1873 = vmatpush1.msra.mxu0 %v1782
      %1874 = vmatprep.subr.mxu0 0.0
      %1875 = vmatpush1.msra.mxu0 %v1783
      %1876 = vmatprep.subr.mxu0 0.0
      %1877 = vmatpush1.msra.mxu0 %v1784
      %1878 = vmatprep.subr.mxu0 0.0
      %1879 = vmatpush1.msra.mxu0 %v1785
      %1880 = vmatprep.subr.mxu0 0.0
      %1881 = vmatpush1.msra.mxu0 %v1786
      %1882 = vmatprep.subr.mxu0 0.0
      %1883 = vmatpush1.msra.mxu0 %v1787
      %1884 = vmatprep.mubr.f32.mxu0 %v1753
      %1885 = vmatmul.mubr.f32.gmra.mrb[0].mxu0 %v1752
      %v1886 = vpop.f32.mrb[0].mxu0
      %v1887 = vadd.f32 %v1435, %v1886
      %v1888 = vpop.f32.mrb[0].mxu0
      %1889 = vdwg.mxu0
      %1890 = vmatprep.subr.mxu0 0.0
      %1891 = vmatpush1.msra.mxu0 %v1788
      %1892 = vmatprep.subr.mxu0 0.0
      %1893 = vmatpush1.msra.mxu0 %v1789
      %1894 = vmatprep.subr.mxu0 0.0
      %1895 = vmatpush1.msra.mxu0 %v1790
      %1896 = vmatprep.subr.mxu0 0.0
      %1897 = vmatpush1.msra.mxu0 %v1791
      %1898 = vmatprep.subr.mxu0 0.0
      %1899 = vmatpush1.msra.mxu0 %v1792
      %1900 = vmatprep.subr.mxu0 0.0
      %1901 = vmatpush1.msra.mxu0 %v1793
      %1902 = vmatprep.subr.mxu0 0.0
      %1903 = vmatpush1.msra.mxu0 %v1794
      %1904 = vmatprep.subr.mxu0 0.0
      %1905 = vmatpush1.msra.mxu0 %v1795
      %1906 = vmatprep.subr.mxu0 0.0
      %1907 = vmatpush1.msra.mxu0 %v1796
      %1908 = vmatprep.subr.mxu0 0.0
      %1909 = vmatpush1.msra.mxu0 %v1797
      %1910 = vmatprep.subr.mxu0 0.0
      %1911 = vmatpush1.msra.mxu0 %v1798
      %1912 = vmatprep.subr.mxu0 0.0
      %1913 = vmatpush1.msra.mxu0 %v1799
      %1914 = vmatprep.subr.mxu0 0.0
      %1915 = vmatpush1.msra.mxu0 %v1800
      %1916 = vmatprep.subr.mxu0 0.0
      %1917 = vmatpush1.msra.mxu0 %v1801
      %1918 = vmatprep.subr.mxu0 0.0
      %1919 = vmatpush1.msra.mxu0 %v1802
      %1920 = vmatprep.subr.mxu0 0.0
      %1921 = vmatpush1.msra.mxu0 %v1803
      %1922 = vmatprep.subr.mxu0 0.0
      %1923 = vmatpush1.msra.mxu0 %v1804
      %1924 = vmatprep.subr.mxu0 0.0
      %1925 = vmatpush1.msra.mxu0 %v1805
      %1926 = vmatprep.subr.mxu0 0.0
      %1927 = vmatpush1.msra.mxu0 %v1806
      %1928 = vmatprep.subr.mxu0 0.0
      %1929 = vmatpush1.msra.mxu0 %v1807
      %1930 = vmatprep.subr.mxu0 0.0
      %1931 = vmatpush1.msra.mxu0 %v1808
      %1932 = vmatprep.subr.mxu0 0.0
      %1933 = vmatpush1.msra.mxu0 %v1809
      %1934 = vmatprep.subr.mxu0 0.0
      %1935 = vmatpush1.msra.mxu0 %v1810
      %1936 = vmatprep.subr.mxu0 0.0
      %1937 = vmatpush1.msra.mxu0 %v1811
      %1938 = vmatprep.subr.mxu0 0.0
      %1939 = vmatpush1.msra.mxu0 %v1812
      %1940 = vmatprep.subr.mxu0 0.0
      %1941 = vmatpush1.msra.mxu0 %v1813
      %1942 = vmatprep.subr.mxu0 0.0
      %1943 = vmatpush1.msra.mxu0 %v1814
      %1944 = vmatprep.subr.mxu0 0.0
      %1945 = vmatpush1.msra.mxu0 %v1815
      %1946 = vmatprep.subr.mxu0 0.0
      %1947 = vmatpush1.msra.mxu0 %v1816
      %1948 = vmatprep.subr.mxu0 0.0
      %1949 = vmatpush1.msra.mxu0 %v1817
      %1950 = vmatprep.subr.mxu0 0.0
      %1951 = vmatpush1.msra.mxu0 %v1818
      %1952 = vmatprep.subr.mxu0 0.0
      %1953 = vmatpush1.msra.mxu0 %v1819
      %1954 = vmatprep.mubr.f32.mxu0 %v1755
      %1955 = vmatmul.mubr.f32.gmra.mrb[0].mxu0 %v1754
      %v1956 = vpop.f32.mrb[0].mxu0
      %v1957 = vadd.f32 %v1887, %v1956
      %v1958 = vpop.f32.mrb[0].mxu0
      %1959 = vdwg.mxu0
      %v1960 = vld [vmem:[%s16] sm:$0x1]
      %v1961 = vmul.f32 %v1957, %v1960
      %v1962 = vld [vmem:[%s17] sm:$0x1]
      %v1963 = vadd.f32 %v1961, %v1962
      %v1964 = vtanh.pop %v1963
      %v1965 = vld [vmem:[%s18] sm:$0xff]
      %v1966 = vld [vmem:[%s18 + $0x8] sm:$0xff]
      %v1967 = vld [vmem:[#allocation2] sm:$0x1]
      %v1969 = vsel %vm854, %v1964, 0
      %1971 = vmatprep.subr.mxu0 0.0
      %1972 = vmatpush1.msra.mxu0 %v1965
      %1973 = vmatprep.subr.mxu0 0.0
      %1974 = vmatpush1.msra.mxu0 %v1966
      %1975 = vmatprep.subr.mxu0 0.0
      %1976 = vmatpush1.msra.mxu0 0.0
      %1977 = vmatprep.subr.mxu0 0.0
      %1978 = vmatpush1.msra.mxu0 0.0
      %1979 = vmatprep.subr.mxu0 0.0
      %1980 = vmatpush1.msra.mxu0 0.0
      %1981 = vmatprep.subr.mxu0 0.0
      %1982 = vmatpush1.msra.mxu0 0.0
      %1983 = vmatprep.subr.mxu0 0.0
      %1984 = vmatpush1.msra.mxu0 0.0
      %1985 = vmatprep.subr.mxu0 0.0
      %1986 = vmatpush1.msra.mxu0 0.0
      %1987 = vmatprep.subr.mxu0 0.0
      %1988 = vmatpush1.msra.mxu0 0.0
      %1989 = vmatprep.subr.mxu0 0.0
      %1990 = vmatpush1.msra.mxu0 0.0
      %1991 = vmatprep.subr.mxu0 0.0
      %1992 = vmatpush1.msra.mxu0 0.0
      %1993 = vmatprep.subr.mxu0 0.0
      %1994 = vmatpush1.msra.mxu0 0.0
      %1995 = vmatprep.subr.mxu0 0.0
      %1996 = vmatpush1.msra.mxu0 0.0
      %1997 = vmatprep.subr.mxu0 0.0
      %1998 = vmatpush1.msra.mxu0 0.0
      %1999 = vmatprep.subr.mxu0 0.0
      %2000 = vmatpush1.msra.mxu0 0.0
      %2001 = vmatprep.subr.mxu0 0.0
      %2002 = vmatpush1.msra.mxu0 0.0
      %2003 = vmatprep.subr.mxu0 0.0
      %2004 = vmatpush1.msra.mxu0 0.0
      %2005 = vmatprep.subr.mxu0 0.0
      %2006 = vmatpush1.msra.mxu0 0.0
      %2007 = vmatprep.subr.mxu0 0.0
      %2008 = vmatpush1.msra.mxu0 0.0
      %2009 = vmatprep.subr.mxu0 0.0
      %2010 = vmatpush1.msra.mxu0 0.0
      %2011 = vmatprep.subr.mxu0 0.0
      %2012 = vmatpush1.msra.mxu0 0.0
      %2013 = vmatprep.subr.mxu0 0.0
      %2014 = vmatpush1.msra.mxu0 0.0
      %2015 = vmatprep.subr.mxu0 0.0
      %2016 = vmatpush1.msra.mxu0 0.0
      %2017 = vmatprep.subr.mxu0 0.0
      %2018 = vmatpush1.msra.mxu0 0.0
      %2019 = vmatprep.subr.mxu0 0.0
      %2020 = vmatpush1.msra.mxu0 0.0
      %2021 = vmatprep.subr.mxu0 0.0
      %2022 = vmatpush1.msra.mxu0 0.0
      %2023 = vmatprep.subr.mxu0 0.0
      %2024 = vmatpush1.msra.mxu0 0.0
      %2025 = vmatprep.subr.mxu0 0.0
      %2026 = vmatpush1.msra.mxu0 0.0
      %2027 = vmatprep.subr.mxu0 0.0
      %2028 = vmatpush1.msra.mxu0 0.0
      %2029 = vmatprep.subr.mxu0 0.0
      %2030 = vmatpush1.msra.mxu0 0.0
      %2031 = vmatprep.subr.mxu0 0.0
      %2032 = vmatpush1.msra.mxu0 0.0
      %2033 = vmatprep.subr.mxu0 0.0
      %2034 = vmatpush1.msra.mxu0 0.0
      %2035 = vmatprep.mubr.f32.mxu0 0.0
      %2036 = vmatmul.mubr.f32.gmra.mrb[0].mxu0 %v1969
      %v2037 = vpop.f32.mrb[0].mxu0
      %v2038 = vadd.f32 %v1967, %v2037
      %v2039 = vpop.f32.mrb[0].mxu0
      %2040 = vdwg.mxu0
      %v2041 = vmul.f32 %v2038, 0.5
      %v2042 = vtanh.pop %v2041
      %v2043 = vmul.f32 %v2042, 0.5
      %v2044 = vadd.f32 %v2043, 0.5
      %vm2045 = vcmask 0
      %2046 = vst.msk [vmem:[%s675] sm:$0x1] %vm2045, %v2044
      %p2047 = scmp.lt.s32.totalorder %s33, 1
      %s2048 = scalar_select %p2047, %s33, 1
      %s2049 = scalar_lea.vmem %s20, %s2048
      // Predicated region
      $region101: #{tpu_custom_call.1} parent=99 // pred_check
        %p2050 = pneg %p491
      $region102: #{tpu_custom_call.1} parent=99 // pred_check_branch
        %2052 = sbr.rel (%p2050) target = $region104
      $region103: #{tpu_custom_call.1} parent=99 // pred_region
        _
      $region104: #{tpu_custom_call.1} parent=99 // pred_fallthru
        _
    $region100: #{tpu_custom_call.1} parent=5 // pred_fallthru
      _
    %p2053 = scmp.le.s32.totalorder 2, %s28
    // Predicated region
    $region105: #{tpu_custom_call.1} parent=5 // pred_check
      %p2054 = pneg %p2053
    $region106: #{tpu_custom_call.1} parent=5 // pred_check_branch
      %2056 = sbr.rel (%p2054) target = $region108
    $region107: #{tpu_custom_call.1} parent=5 // pred_region
      %s2057 = ssub.s32 %s28, 2
      // Predicated region
      $region109: #{tpu_custom_call.1} parent=107 // pred_check
        %p2058 = pneg %p497
      $region110: #{tpu_custom_call.1} parent=107 // pred_check_branch
        %2060 = sbr.rel (%p2058) target = $region112
      $region111: #{tpu_custom_call.1} parent=107 // pred_region
        %p2061 = scmp.lt.s32.totalorder %s34, 1
        %s2062 = scalar_select %p2061, %s34, 1
        %s2063 = scalar_lea.vmem %s20, %s2062
      $region112: #{tpu_custom_call.1} parent=107 // pred_fallthru
        _
    $region108: #{tpu_custom_call.1} parent=5 // pred_fallthru
      _
  $region6: #{tpu_custom_call.1} parent=0 // loop_footer
    %s32 = sadd.s32 1, %s28
  $region7: #{tpu_custom_call.1} parent=0 // loop_footer_branch
    %27 = sbr.rel target = $region3
  $region8: #{tpu_custom_call.1} parent=0 // loop_exit
    _

</llo_original>
